<compile_context>
chip_gen: v7x
topology: tpu7x:2x2x1
jax: 0.10.0
libtpu: 0.0.40
codegen_flags: <defaults>
</compile_context>

<pallas_src>
import functools
import math

import jax
import jax.numpy as jnp
from jax.experimental import pallas as pl
from jax.experimental.pallas import tpu as pltpu

HIDDEN = 256


def _round_up(x, m):
    return ((x + m - 1) // m) * m


def _location_kernel(std, h_ref, w_ref, b_ref, noise_ref, l_ref):
    # h: (tile_b, 256) streamed in native dtype, upcast in-register.
    h = h_ref[...].astype(jnp.float32)
    # w: (8, 256), row 0 is the real weight, rows 1..7 are zero padding (sublane align).
    w = w_ref[...].astype(jnp.float32)

    # mu8 = w @ h^T on the MXU (transposed-RHS contraction): (8, tile_b), lane-dense.
    mu8 = jax.lax.dot_general(
        w, h, (((1,), (1,)), ((), ())),
        preferred_element_type=jnp.float32,
        precision=jax.lax.Precision.HIGHEST)
    mu = mu8[0:1, :] + b_ref[0, 0]                       # (1, tile_b)

    # Reparameterized sample from Normal(mu, std); eps is lane-dense (1, tile_b).
    eps = noise_ref[...].astype(jnp.float32)
    l_ref[...] = jax.nn.sigmoid(mu + std * eps)          # unmasked lane-dense store


def _location_reference(h, weight, bias, noise, std):
    """Pure-JAX path: tiny-batch fallback and numerical reference."""
    h32 = h.astype(jnp.float32)
    w32 = jnp.asarray(weight).astype(jnp.float32)
    b32 = jnp.asarray(bias, jnp.float32).reshape(1, 1)
    mu = jnp.sum(h32 * w32, axis=-1, keepdims=True) + b32
    eps = jnp.asarray(noise).astype(jnp.float32).reshape(-1, 1)
    l_raw = mu + std * eps
    logpi = (-0.5 * ((l_raw - mu) / std) ** 2
             - math.log(std) - 0.5 * math.log(2.0 * math.pi))
    return logpi, jax.nn.sigmoid(l_raw)


def location_forward(h, weight, bias, noise, std, *, tile_b=None,
                     min_pallas_batch=512):
    """h: (B, 256); weight: (1, 256); bias: (1,)/(1,1); noise: (B, 1) ~ N(0, 1)."""
    h = jax.lax.stop_gradient(h)                          # h.detach()
    std = float(std)                                      # static ctor constant
    B, hidden = h.shape
    assert hidden == HIDDEN, f"expected hidden={HIDDEN}, got {hidden}"

    weight = jnp.asarray(weight)
    noise = jnp.asarray(noise)
    bias32 = jnp.asarray(bias, jnp.float32).reshape(1, 1)

    # logpi never touches h: log_prob of the reparameterized sample reduces exactly to
    # -0.5*eps^2 + const, so it stays in the wrapper (XLA fuses this tiny chain).
    log_norm_const = -(math.log(std) + 0.5 * math.log(2.0 * math.pi))
    eps32 = noise.astype(jnp.float32).reshape(B, 1)
    logpi = -0.5 * (eps32 * eps32) + log_norm_const

    if B < min_pallas_batch:
        # Below ~one tile of rows, launch + grid-step overhead dominates.
        _, l = _location_reference(h, weight, bias32, noise, std)
        return logpi, jax.lax.stop_gradient(l)

    if tile_b is None:
        # Bigger tiles for sub-32-bit activations (same bytes/step, ~95% of roofline).
        tile_b = 8192 if jnp.dtype(h.dtype).itemsize <= 2 else 4096
    tile_b = _round_up(min(tile_b, _round_up(B, 128)), 128)
    if pl.cdiv(B, tile_b) < 2 and B > 128:
        # Keep >=2 grid steps so v7x can shard the batch axis over both TensorCores.
        tile_b = _round_up(pl.cdiv(B, 2), 128)
    grid = (pl.cdiv(B, tile_b),)

    # Zero-pad weight (1,256) -> (8,256): sublane-aligned MXU operand (rows 1..7 unused).
    w_pad = jnp.pad(weight, ((0, 7), (0, 0)))
    noise_row = noise.reshape(1, B)                       # lane-dense N(0,1) draws

    kernel = functools.partial(_location_kernel, std)
    l_row = pl.pallas_call(
        kernel,
        grid=grid,
        out_shape=jax.ShapeDtypeStruct((1, B), jnp.float32),
        in_specs=[
            # h: streamed in native dtype, double-buffered batch tiles.
            pl.BlockSpec((tile_b, HIDDEN), lambda i: (i, 0)),
            # weight: same block every step -> stays resident in VMEM.
            pl.BlockSpec((8, HIDDEN), lambda i: (0, 0)),
            # bias: scalar in SMEM (no padded VMEM tile, no extra DMA).
            pl.BlockSpec(memory_space=pltpu.MemorySpace.SMEM),
            # noise: lane-dense row, native dtype.
            pl.BlockSpec((1, tile_b), lambda i: (0, i)),
        ],
        # l: lane-dense row -> unmasked full-lane stores, dense writeback DMA.
        out_specs=pl.BlockSpec((1, tile_b), lambda i: (0, i)),
        compiler_params=pltpu.CompilerParams(
            dimension_semantics=("parallel",),
            # Worst case (bf16 tile_b=8192: 8 MiB double-buffered h + f32 upcast +
            # lane-dense rows) ~ 17 MiB. 32 MiB == v7x default scoped limit and is far
            # below physical VMEM on v5e/v6e, so the same cap is safe on all chips.
            vmem_limit_bytes=32 * 1024 * 1024),
    )(h, w_pad, bias32, noise_row)

    l = l_row.reshape(B, 1)
    return logpi, jax.lax.stop_gradient(l)                # l.detach()


if __name__ == "__main__":
    key = jax.random.PRNGKey(0)
    k_w, k_b, k_h, k_n, k_h2, k_n2, k_h3, k_n3 = jax.random.split(key, 8)

    std = 0.17
    # PyTorch nn.Linear(256, 1) default init range U(-1/sqrt(256), 1/sqrt(256)).
    bound = 1.0 / math.sqrt(HIDDEN)
    weight = jax.random.uniform(k_w, (1, HIDDEN), jnp.float32, -bound, bound)
    bias = jax.random.uniform(k_b, (1, 1), jnp.float32, -bound, bound)

    # --- Pallas path (f32): B=512 rows, tile_b=256 -> 2 grid steps. ---
    B = 512
    h = jax.random.normal(k_h, (B, HIDDEN), jnp.float32)
    noise = jax.random.normal(k_n, (B, 1), jnp.float32)
    logpi, l = location_forward(h, weight, bias, noise, std,
                                tile_b=256, min_pallas_batch=256)
    jax.block_until_ready((logpi, l))
    logpi_ref, l_ref = _location_reference(h, weight, bias, noise, std)
    assert logpi.shape == (B, 1) and l.shape == (B, 1)
    assert jnp.allclose(logpi, logpi_ref, atol=1e-5), "logpi mismatch (f32)"
    assert jnp.allclose(l, l_ref, atol=1e-4), "l mismatch (f32)"

    # --- bf16 activations: streamed as bf16, upcast in-register in the kernel. ---
    h_bf16 = h.astype(jnp.bfloat16)
    logpi_b, l_b = location_forward(h_bf16, weight, bias, noise, std,
                                    tile_b=256, min_pallas_batch=256)
    jax.block_until_ready((logpi_b, l_b))
    logpi_bref, l_bref = _location_reference(h_bf16, weight, bias, noise, std)
    assert jnp.allclose(logpi_b, logpi_bref, atol=1e-4), "logpi mismatch (bf16)"
    assert jnp.allclose(l_b, l_bref, atol=1e-4), "l mismatch (bf16)"

    # --- B not a multiple of the tile: masked tail tile handled by Pallas. ---
    B3 = 300
    h3 = jax.random.normal(k_h3, (B3, HIDDEN), jnp.float32)
    noise3 = jax.random.normal(k_n3, (B3, 1), jnp.float32)
    logpi3, l3 = location_forward(h3, weight, bias, noise3, std,
                                  tile_b=128, min_pallas_batch=256)
    jax.block_until_ready((logpi3, l3))
    logpi3_ref, l3_ref = _location_reference(h3, weight, bias, noise3, std)
    assert jnp.allclose(logpi3, logpi3_ref, atol=1e-5), "logpi mismatch (tail)"
    assert jnp.allclose(l3, l3_ref, atol=1e-4), "l mismatch (tail)"

    # --- Tiny batch (module-sized example): dispatches to the fused JAX path. ---
    B2 = 8
    h2 = jax.random.normal(k_h2, (B2, HIDDEN), jnp.float32)
    noise2 = jax.random.normal(k_n2, (B2, 1), jnp.float32)
    logpi2, l2 = location_forward(h2, weight, bias, noise2, std)
    jax.block_until_ready((logpi2, l2))
    logpi2_ref, l2_ref = _location_reference(h2, weight, bias, noise2, std)
    assert jnp.allclose(logpi2, logpi2_ref, atol=1e-5), "logpi mismatch (tiny B)"
    assert jnp.allclose(l2, l2_ref, atol=1e-4), "l mismatch (tiny B)"

    print("KERNEL_OK")
</pallas_src>

<mosaic_0001>
module attributes {stable_mosaic.version = 11 : i64} {
  func.func @_location_kernel(%arg0: i32, %arg1: memref<256x256xf32, #tpu.memory_space<vmem>>, %arg2: memref<8x256xf32, #tpu.memory_space<vmem>>, %arg3: memref<1x1xf32, #tpu.memory_space<smem>>, %arg4: memref<1x256xf32, #tpu.memory_space<vmem>>, %arg5: memref<1x256xf32, #tpu.memory_space<vmem>>) attributes {dimension_semantics = [#tpu.dimension_semantics<parallel>], iteration_bounds = array<i64: 2>, scalar_prefetch = 0 : i64, scratch_operands = 0 : i64, tpu.core_type = #tpu.core_type<tc>, window_params = [{transform_indices = @transform_0, window_bounds = array<i64: 256, 256>}, {pipeline_mode = #tpu.pipeline_mode<synchronous>, transform_indices = @transform_1, window_bounds = array<i64: 8, 256>}, {transform_indices = @transform_2, window_bounds = array<i64: 1, 1>}, {transform_indices = @transform_3, window_bounds = array<i64: 1, 256>}, {transform_indices = @transform_4, window_bounds = array<i64: 1, 256>}]} {
    %c0 = arith.constant 0 : index
    %c0_0 = arith.constant 0 : index
    %0 = vector.load %arg1[%c0, %c0_0] : memref<256x256xf32, #tpu.memory_space<vmem>>, vector<256x256xf32>
    %c0_1 = arith.constant 0 : index
    %c0_2 = arith.constant 0 : index
    %1 = vector.load %arg2[%c0_1, %c0_2] : memref<8x256xf32, #tpu.memory_space<vmem>>, vector<8x256xf32>
    %cst = arith.constant dense<0.000000e+00> : vector<8x256xf32>
    %2 = tpu.matmul %1, %0, %cst {dimension_numbers = #tpu.dot_dimension_numbers<[1], [1], [0], [0], [0, 0, 1, 0], [], []>, precision = #tpu.contract_precision<fp32>} : vector<8x256xf32>, vector<256x256xf32>, vector<8x256xf32> -> vector<8x256xf32>
    %3 = vector.extract_strided_slice %2 {offsets = [0, 0], sizes = [1, 256], strides = [1, 1]} : vector<8x256xf32> to vector<1x256xf32>
    %c0_3 = arith.constant 0 : index
    %c0_4 = arith.constant 0 : index
    %4 = memref.load %arg3[%c0_3, %c0_4] : memref<1x1xf32, #tpu.memory_space<smem>>
    %5 = vector.broadcast %4 : f32 to vector<1x256xf32>
    %6 = arith.addf %3, %5 : vector<1x256xf32>
    %c0_5 = arith.constant 0 : index
    %c0_6 = arith.constant 0 : index
    %7 = vector.load %arg4[%c0_5, %c0_6] : memref<1x256xf32, #tpu.memory_space<vmem>>, vector<1x256xf32>
    %cst_7 = arith.constant 1.700000e-01 : f32
    %8 = vector.broadcast %cst_7 : f32 to vector<1x256xf32>
    %9 = arith.mulf %8, %7 : vector<1x256xf32>
    %10 = arith.addf %6, %9 : vector<1x256xf32>
    %11 = arith.negf %10 : vector<1x256xf32>
    %12 = math.exp %11 : vector<1x256xf32>
    %cst_8 = arith.constant 1.000000e+00 : f32
    %13 = vector.broadcast %cst_8 : f32 to vector<1x256xf32>
    %14 = arith.addf %13, %12 : vector<1x256xf32>
    %15 = arith.divf %13, %14 : vector<1x256xf32>
    %c0_9 = arith.constant 0 : index
    %c0_10 = arith.constant 0 : index
    %16 = vector.load %arg5[%c0_9, %c0_10] : memref<1x256xf32, #tpu.memory_space<vmem>>, vector<1x256xf32>
    tpu.vector_store %arg5[%c0_9, %c0_10], %15 {strides = array<i32>} : memref<1x256xf32, #tpu.memory_space<vmem>>, vector<1x256xf32>,
    return
  }
  func.func @transform_0(%arg0: i32) -> (i32, i32) {
    %c0_i32 = arith.constant 0 : i32
    %c0_i32_0 = arith.constant 0 : i32
    return %arg0, %c0_i32 : i32, i32
  }
  func.func @transform_1(%arg0: i32) -> (i32, i32) {
    %c0_i32 = arith.constant 0 : i32
    %c0_i32_0 = arith.constant 0 : i32
    %c0_i32_1 = arith.constant 0 : i32
    return %c0_i32, %c0_i32_0 : i32, i32
  }
  func.func @transform_2(%arg0: i32) -> (i32, i32) {
    %c0_i32 = arith.constant 0 : i32
    %c0_i32_0 = arith.constant 0 : i32
    %c0_i32_1 = arith.constant 0 : i32
    return %c0_i32, %c0_i32_0 : i32, i32
  }
  func.func @transform_3(%arg0: i32) -> (i32, i32) {
    %c0_i32 = arith.constant 0 : i32
    %c0_i32_0 = arith.constant 0 : i32
    return %c0_i32, %arg0 : i32, i32
  }
  func.func @transform_4(%arg0: i32) -> (i32, i32) {
    %c0_i32 = arith.constant 0 : i32
    %c0_i32_0 = arith.constant 0 : i32
    return %c0_i32, %arg0 : i32, i32
  }
}

</mosaic_0001>

<llo_original>
// kernel: tpu_custom_call.1
$region0: #{tpu_custom_call.1}
  #allocation0 [shape = 'u32[]', space=smem, size = 0x4, offset = 0x4, fixed_abs, tag = 'smem constant byte address 0x4 - core index']
  #allocation1 [shape = 'u32[144,128]{1,0:T(1,128)}', space=vmem, size = 0x12000, scoped, tag = 'internal scratch']
  #allocation2 [shape = 'f32[1,1]{1,0:T(1,128)S(6)}', space=smem, size = 0x200, scoped, tag = 'scoped memory for tpu_custom_call.1']
  %s0 = inlined_call_operand.hbm [shape: f32[512,256], index: 0, kind: input, shape index: {}]
  %s1 = inlined_call_operand.hbm [shape: f32[8,256], index: 1, kind: input, shape index: {}]
  %s2 = inlined_call_operand.<no memory space> [shape: f32[1,1], index: 2, kind: input, shape index: {}]
  %s3 = inlined_call_operand.vmem [shape: f32[1,512], index: 3, kind: input, shape index: {}]
  %s4 = inlined_call_operand.hbm [shape: f32[1,512], index: 4, kind: output, shape index: {}]
  %s5 = sld [smem:[#allocation0]]
  $region57: #{tpu_custom_call.1} parent=0
    _
  %s7 = ssub.s32 1, %s5
  %s8 = scalar_select 0, %s7, %s5
  %9 = sst [smem:[#allocation2]] %s2
  $region1: #{tpu_custom_call.1} parent=0
    #allocation3 [shape = 'u8[524288]{0}', space=vmem, size = 0x80000, scoped, tag = 'input window, operand 0']
    #allocation4 [shape = 's32[2]{0}', space=sflag, size = 0x8, scoped, tag = 'scoped memory for tpu_custom_call.1']
    #allocation5 [shape = 's32[2]{0}', space=sflag, size = 0x8, scoped, tag = 'scoped memory for tpu_custom_call.1']
    #allocation6 [shape = 'u8[8192]{0}', space=vmem, size = 0x2000, scoped, tag = 'input window, operand 1, single buffered']
    #allocation7 [shape = 's32[1]{0}', space=sflag, size = 0x4, scoped, tag = 'scoped memory for tpu_custom_call.1']
    #allocation8 [shape = 'u8[2048]{0}', space=vmem, size = 0x800, scoped, tag = 'output window, operand 0']
    %10 = vsyncpa [#allocation4], 0
    %s11 = scalar_lea.sflag [#allocation4], 1
    %12 = vsyncpa %s11, 0
    %13 = vsyncpa [#allocation7], 0
    %14 = vsyncpa [#allocation5], 0
    %s15 = scalar_lea.sflag [#allocation5], 1
    %16 = vsyncpa %s15, 0
    loop: start=0, step=1, limit=4
    $region2: #{tpu_custom_call.1} parent=1 // loop_pre_header
      _
    $region3: #{tpu_custom_call.1} parent=1 // loop_header
      %s18 = sphi 0, %s22
      %p19 = scmp.ge.s32.totalorder %s18, 4
      %s28 = sphi 0, %s30
      %s31 = sphi 0, %s28
      %s32 = sphi 0, %s31
      %s48 = sphi 0, %s32
      %s52 = sphi 0, %s52
      %s54 = sphi 0, %s52
      %s55 = sphi 0, %s54
      %s69 = sphi 0, %s55
      %s73 = sphi 0, %s73
      %s75 = sphi 0, %s73
      %s76 = sphi 0, %s75
      %s90 = sphi 0, %s76
      %s96 = sphi 0, %s98
      %s99 = sphi 0, %s96
      %s100 = sphi 0, %s99
      %s116 = sphi 0, %s100
      %s122 = sphi 0, %s124
      %s125 = sphi 0, %s122
      %s126 = sphi 0, %s125
      %s142 = sphi 0, %s126
    $region4: #{tpu_custom_call.1} parent=1 // loop_header_branch
      %21 = sbr.rel (%p19) target = $region8
    $region5: #{tpu_custom_call.1} parent=1 // loop_body
      %s23 = ssub.s32 %s18, 1
      %s24 = ssub.s32 %s18, 2
      %s25 = sadd.s32 %s18, 1
      %s26 = ssub.s32 %s18, %s25
      %p27 = scmp.eq.s32.totalorder %s26, 0
      %s29 = sadd.s32 %s28, 1
      %s30 = scalar_select %p27, %s28, %s29
      %p33 = pneg %p27
      %p34 = scmp.eq.s32.totalorder %s18, 1
      %p35 = por %p33, %p34
      %p36 = scmp.ne.s32.totalorder %s28, %s31
      %p37 = scmp.eq.s32.totalorder %s18, 0
      %p38 = por %p36, %p37
      %p39 = scmp.ne.s32.totalorder %s28, %s31
      %p40 = scmp.eq.s32.totalorder %s23, 1
      %p41 = por %p39, %p40
      %p42 = scmp.ne.s32.totalorder %s31, %s32
      %p43 = scmp.eq.s32.totalorder %s23, 0
      %p44 = por %p42, %p43
      %p45 = scmp.ne.s32.totalorder %s31, %s32
      %p46 = scmp.eq.s32.totalorder %s24, 1
      %p47 = por %p45, %p46
      %p49 = scmp.ne.s32.totalorder %s32, %s48
      %p50 = scmp.eq.s32.totalorder %s24, 0
      %p51 = por %p49, %p50
      %s53 = sadd.s32 %s52, 1
      %p56 = scmp.eq.s32.totalorder %s18, 1
      %p57 = scmp.ne.s32.totalorder %s52, %s54
      %p58 = scmp.eq.s32.totalorder %s18, 0
      %p59 = por %p57, %p58
      %p60 = scmp.ne.s32.totalorder %s52, %s54
      %p61 = scmp.eq.s32.totalorder %s23, 1
      %p62 = por %p60, %p61
      %p63 = scmp.ne.s32.totalorder %s54, %s55
      %p64 = scmp.eq.s32.totalorder %s23, 0
      %p65 = por %p63, %p64
      %p66 = scmp.ne.s32.totalorder %s54, %s55
      %p67 = scmp.eq.s32.totalorder %s24, 1
      %p68 = por %p66, %p67
      %p70 = scmp.ne.s32.totalorder %s55, %s69
      %p71 = scmp.eq.s32.totalorder %s24, 0
      %p72 = por %p70, %p71
      %s74 = sadd.s32 %s73, 1
      %p77 = scmp.eq.s32.totalorder %s18, 1
      %p78 = scmp.ne.s32.totalorder %s73, %s75
      %p79 = scmp.eq.s32.totalorder %s18, 0
      %p80 = por %p78, %p79
      %p81 = scmp.ne.s32.totalorder %s73, %s75
      %p82 = scmp.eq.s32.totalorder %s23, 1
      %p83 = por %p81, %p82
      %p84 = scmp.ne.s32.totalorder %s75, %s76
      %p85 = scmp.eq.s32.totalorder %s23, 0
      %p86 = por %p84, %p85
      %p87 = scmp.ne.s32.totalorder %s75, %s76
      %p88 = scmp.eq.s32.totalorder %s24, 1
      %p89 = por %p87, %p88
      %p91 = scmp.ne.s32.totalorder %s76, %s90
      %p92 = scmp.eq.s32.totalorder %s24, 0
      %p93 = por %p91, %p92
      %s94 = ssub.s32 %s18, %s25
      %p95 = scmp.eq.s32.totalorder %s94, 0
      %s97 = sadd.s32 %s96, 1
      %s98 = scalar_select %p95, %s96, %s97
      %p101 = pneg %p95
      %p102 = scmp.eq.s32.totalorder %s18, 1
      %p103 = por %p101, %p102
      %p104 = scmp.ne.s32.totalorder %s96, %s99
      %p105 = scmp.eq.s32.totalorder %s18, 0
      %p106 = por %p104, %p105
      %p107 = scmp.ne.s32.totalorder %s96, %s99
      %p108 = scmp.eq.s32.totalorder %s23, 1
      %p109 = por %p107, %p108
      %p110 = scmp.ne.s32.totalorder %s99, %s100
      %p111 = scmp.eq.s32.totalorder %s23, 0
      %p112 = por %p110, %p111
      %p113 = scmp.ne.s32.totalorder %s99, %s100
      %p114 = scmp.eq.s32.totalorder %s24, 1
      %p115 = por %p113, %p114
      %p117 = scmp.ne.s32.totalorder %s100, %s116
      %p118 = scmp.eq.s32.totalorder %s24, 0
      %p119 = por %p117, %p118
      %s120 = ssub.s32 %s18, %s25
      %p121 = scmp.eq.s32.totalorder %s120, 0
      %s123 = sadd.s32 %s122, 1
      %s124 = scalar_select %p121, %s122, %s123
      %p127 = pneg %p121
      %p128 = scmp.eq.s32.totalorder %s18, 1
      %p129 = por %p127, %p128
      %p130 = scmp.ne.s32.totalorder %s122, %s125
      %p131 = scmp.eq.s32.totalorder %s18, 0
      %p132 = por %p130, %p131
      %p133 = scmp.ne.s32.totalorder %s122, %s125
      %p134 = scmp.eq.s32.totalorder %s23, 1
      %p135 = por %p133, %p134
      %p136 = scmp.ne.s32.totalorder %s125, %s126
      %p137 = scmp.eq.s32.totalorder %s23, 0
      %p138 = por %p136, %p137
      %p139 = scmp.ne.s32.totalorder %s125, %s126
      %p140 = scmp.eq.s32.totalorder %s24, 1
      %p141 = por %p139, %p140
      %p143 = scmp.ne.s32.totalorder %s126, %s142
      %p144 = scmp.eq.s32.totalorder %s24, 0
      %p145 = por %p143, %p144
      %p146 = scmp.le.s32.totalorder 1, %s18
      %p147 = scmp.lt.s32.totalorder %s18, 3
      %p148 = pnand %p146, %p147
      %p149 = pneg %p148
      // Predicated region
      $region9: #{tpu_custom_call.1} parent=5 // pred_check
        _
      $region10: #{tpu_custom_call.1} parent=5 // pred_check_branch
        %151 = sbr.rel (%p148) target = $region12
      $region11: #{tpu_custom_call.1} parent=5 // pred_region
        %s152 = ssub.s32 %s18, 1
        // Predicated region
        $region13: #{tpu_custom_call.1} parent=11 // pred_check
          %p153 = pneg %p65
        $region14: #{tpu_custom_call.1} parent=11 // pred_check_branch
          %155 = sbr.rel (%p153) target = $region16
        $region15: #{tpu_custom_call.1} parent=11 // pred_region
          %s157 = ssub.s32 256, 256
          %158 = vsyncadd [#allocation7], %s157
          %s160 = sshll.u32 [#allocation6], 4
          %s161 = int_to_ptr.vmem [resolvable:$true] %s160
          %163 = dma.hbm_to_vmem [thread:$0]  %s1, 256, %s161, [#allocation7]
        $region16: #{tpu_custom_call.1} parent=11 // pred_fallthru
          _
        // Predicated region
        $region17: #{tpu_custom_call.1} parent=11 // pred_check
          %p164 = pneg %p86
        $region18: #{tpu_custom_call.1} parent=11 // pred_check_branch
          %166 = sbr.rel (%p164) target = $region20
        $region19: #{tpu_custom_call.1} parent=11 // pred_region
          _
        $region20: #{tpu_custom_call.1} parent=11 // pred_fallthru
          _
      $region12: #{tpu_custom_call.1} parent=5 // pred_fallthru
        _
      %p167 = scmp.lt.s32.totalorder %s18, 2
      // Predicated region
      $region21: #{tpu_custom_call.1} parent=5 // pred_check
        %p168 = pneg %p167
      $region22: #{tpu_custom_call.1} parent=5 // pred_check_branch
        %170 = sbr.rel (%p168) target = $region24
      $region23: #{tpu_custom_call.1} parent=5 // pred_region
        // Predicated region
        $region25: #{tpu_custom_call.1} parent=23 // pred_check
          %p171 = pneg %p38
        $region26: #{tpu_custom_call.1} parent=23 // pred_check_branch
          %173 = sbr.rel (%p171) target = $region28
        $region27: #{tpu_custom_call.1} parent=23 // pred_region
          %s174 = sand.u32 %s28, 1
          %s175 = scalar_lea.sflag [#allocation4], %s174
          %s176 = sand.u32 %s28, 1
          %s177 = smul.addr %s176, 512
          %s178 = scalar_lea.vmem [#allocation3], %s177
          %s179 = smul.u32 32, %s18
          %s181 = ssub.s32 8192, 8192
          %182 = vsyncadd %s175, %s181
          %s183 = smul.addr %s179, 2
          %s184 = smul.addr %s183, 128
          %s185 = scalar_lea.hbm %s0, %s184
          %s186 = sshll.u32 %s178, 4
          %s187 = int_to_ptr.vmem [resolvable:$true] %s186
          %192 = dma.hbm_to_vmem [thread:$0]  %s185, 8192, %s187, %s175, 256, 256, 16
        $region28: #{tpu_custom_call.1} parent=23 // pred_fallthru
          _
        // Predicated region
        $region29: #{tpu_custom_call.1} parent=23 // pred_check
          %p193 = pneg %p106
        $region30: #{tpu_custom_call.1} parent=23 // pred_check_branch
          %195 = sbr.rel (%p193) target = $region32
        $region31: #{tpu_custom_call.1} parent=23 // pred_region
          %s196 = smul.u32 2, %s18
          %p197 = scmp.lt.s32.totalorder %s196, 3
          %s198 = scalar_select %p197, %s196, 3
          %s199 = scalar_lea.vmem %s3, %s198
          %s200 = smul.u32 2, %s18
        $region32: #{tpu_custom_call.1} parent=23 // pred_fallthru
          _
      $region24: #{tpu_custom_call.1} parent=5 // pred_fallthru
        _
      %p201 = scmp.le.s32.totalorder 1, %s18
      %p202 = scmp.lt.s32.totalorder %s18, 3
      %p203 = pnand %p201, %p202
      %p204 = pneg %p203
      // Predicated region
      $region33: #{tpu_custom_call.1} parent=5 // pred_check
        _
      $region34: #{tpu_custom_call.1} parent=5 // pred_check_branch
        %206 = sbr.rel (%p203) target = $region36
      $region35: #{tpu_custom_call.1} parent=5 // pred_region
        %s207 = ssub.s32 %s18, 1
        %s208 = sand.u32 %s31, 1
        %s209 = scalar_lea.sflag [#allocation4], %s208
        %s210 = sand.u32 %s31, 1
        %s211 = smul.addr %s210, 512
        %s212 = scalar_lea.vmem [#allocation3], %s211
        // Predicated region
        $region37: #{tpu_custom_call.1} parent=35 // pred_check
          %p213 = pneg %p44
        $region38: #{tpu_custom_call.1} parent=35 // pred_check_branch
          %215 = sbr.rel (%p213) target = $region40
        $region39: #{tpu_custom_call.1} parent=35 // pred_region
          %216 = dma.done %s209, 8192
        $region40: #{tpu_custom_call.1} parent=35 // pred_fallthru
          _
        // Predicated region
        $region41: #{tpu_custom_call.1} parent=35 // pred_check
          %p217 = pneg %p65
        $region42: #{tpu_custom_call.1} parent=35 // pred_check_branch
          %219 = sbr.rel (%p217) target = $region44
        $region43: #{tpu_custom_call.1} parent=35 // pred_region
          %220 = dma.done [#allocation7], 256
        $region44: #{tpu_custom_call.1} parent=35 // pred_fallthru
          _
        %s221 = sand.u32 %s31, 1
        %s222 = scalar_lea.sflag [#allocation4], %s221
        %s223 = sand.u32 %s31, 1
        %s224 = smul.addr %s223, 512
        %s225 = scalar_lea.vmem [#allocation3], %s224
        %p226 = pneg %p44
        %p227 = pneg %p41
        %p228 = pneg %p65
        %p229 = pneg %p62
        %p230 = pneg %p86
        %p231 = pneg %p83
        %s232 = smul.u32 2, %s23
        %p233 = scmp.lt.s32.totalorder %s232, 3
        %s234 = scalar_select %p233, %s232, 3
        %s235 = scalar_lea.vmem %s3, %s234
        %p236 = pneg %p112
        %p237 = pneg %p109
        %p238 = pneg %p138
        %p239 = pneg %p135
        %s240 = sand.u32 %s125, 1
        %s241 = scalar_lea.sflag [#allocation5], %s240
        %s242 = sand.u32 %s125, 1
        %s243 = smul.addr %s242, 2
        %s244 = scalar_lea.vmem [#allocation8], %s243
        %s245 = smul.u32 32, %s23
        %s246 = smul.u32 2, %s23
        %p247 = scmp.lt.s32.totalorder %s246, 3
        %s248 = scalar_select %p247, %s246, 3
        %s249 = scalar_lea.vmem %s3, %s248
        %s250 = smul.u32 2, %s23
        %s251 = smul.u32 2, %s23
        %v252 = vld [vmem:[%s212] sm:$0xff]
        %v253 = vld [vmem:[%s212 + $0x8] sm:$0xff]
        %v254 = vld [vmem:[%s212 + $0x10] sm:$0xff]
        %v255 = vld [vmem:[%s212 + $0x18] sm:$0xff]
        %v256 = vld [vmem:[%s212 + $0x20] sm:$0xff]
        %v257 = vld [vmem:[%s212 + $0x28] sm:$0xff]
        %v258 = vld [vmem:[%s212 + $0x30] sm:$0xff]
        %v259 = vld [vmem:[%s212 + $0x38] sm:$0xff]
        %v260 = vld [vmem:[%s212 + $0x40] sm:$0xff]
        %v261 = vld [vmem:[%s212 + $0x48] sm:$0xff]
        %v262 = vld [vmem:[%s212 + $0x50] sm:$0xff]
        %v263 = vld [vmem:[%s212 + $0x58] sm:$0xff]
        %v264 = vld [vmem:[%s212 + $0x60] sm:$0xff]
        %v265 = vld [vmem:[%s212 + $0x68] sm:$0xff]
        %v266 = vld [vmem:[%s212 + $0x70] sm:$0xff]
        %v267 = vld [vmem:[%s212 + $0x78] sm:$0xff]
        %v268 = vld [vmem:[%s212 + $0x80] sm:$0xff]
        %v269 = vld [vmem:[%s212 + $0x88] sm:$0xff]
        %v270 = vld [vmem:[%s212 + $0x90] sm:$0xff]
        %v271 = vld [vmem:[%s212 + $0x98] sm:$0xff]
        %v272 = vld [vmem:[%s212 + $0xa0] sm:$0xff]
        %v273 = vld [vmem:[%s212 + $0xa8] sm:$0xff]
        %v274 = vld [vmem:[%s212 + $0xb0] sm:$0xff]
        %v275 = vld [vmem:[%s212 + $0xb8] sm:$0xff]
        %v276 = vld [vmem:[%s212 + $0xc0] sm:$0xff]
        %v277 = vld [vmem:[%s212 + $0xc8] sm:$0xff]
        %v278 = vld [vmem:[%s212 + $0xd0] sm:$0xff]
        %v279 = vld [vmem:[%s212 + $0xd8] sm:$0xff]
        %v280 = vld [vmem:[%s212 + $0xe0] sm:$0xff]
        %v281 = vld [vmem:[%s212 + $0xe8] sm:$0xff]
        %v282 = vld [vmem:[%s212 + $0xf0] sm:$0xff]
        %v283 = vld [vmem:[%s212 + $0xf8] sm:$0xff]
        %v284 = vld [vmem:[%s212 + $0x100] sm:$0xff]
        %v285 = vld [vmem:[%s212 + $0x108] sm:$0xff]
        %v286 = vld [vmem:[%s212 + $0x110] sm:$0xff]
        %v287 = vld [vmem:[%s212 + $0x118] sm:$0xff]
        %v288 = vld [vmem:[%s212 + $0x120] sm:$0xff]
        %v289 = vld [vmem:[%s212 + $0x128] sm:$0xff]
        %v290 = vld [vmem:[%s212 + $0x130] sm:$0xff]
        %v291 = vld [vmem:[%s212 + $0x138] sm:$0xff]
        %v292 = vld [vmem:[%s212 + $0x140] sm:$0xff]
        %v293 = vld [vmem:[%s212 + $0x148] sm:$0xff]
        %v294 = vld [vmem:[%s212 + $0x150] sm:$0xff]
        %v295 = vld [vmem:[%s212 + $0x158] sm:$0xff]
        %v296 = vld [vmem:[%s212 + $0x160] sm:$0xff]
        %v297 = vld [vmem:[%s212 + $0x168] sm:$0xff]
        %v298 = vld [vmem:[%s212 + $0x170] sm:$0xff]
        %v299 = vld [vmem:[%s212 + $0x178] sm:$0xff]
        %v300 = vld [vmem:[%s212 + $0x180] sm:$0xff]
        %v301 = vld [vmem:[%s212 + $0x188] sm:$0xff]
        %v302 = vld [vmem:[%s212 + $0x190] sm:$0xff]
        %v303 = vld [vmem:[%s212 + $0x198] sm:$0xff]
        %v304 = vld [vmem:[%s212 + $0x1a0] sm:$0xff]
        %v305 = vld [vmem:[%s212 + $0x1a8] sm:$0xff]
        %v306 = vld [vmem:[%s212 + $0x1b0] sm:$0xff]
        %v307 = vld [vmem:[%s212 + $0x1b8] sm:$0xff]
        %v308 = vld [vmem:[%s212 + $0x1c0] sm:$0xff]
        %v309 = vld [vmem:[%s212 + $0x1c8] sm:$0xff]
        %v310 = vld [vmem:[%s212 + $0x1d0] sm:$0xff]
        %v311 = vld [vmem:[%s212 + $0x1d8] sm:$0xff]
        %v312 = vld [vmem:[%s212 + $0x1e0] sm:$0xff]
        %v313 = vld [vmem:[%s212 + $0x1e8] sm:$0xff]
        %v314 = vld [vmem:[%s212 + $0x1f0] sm:$0xff]
        %v315 = vld [vmem:[%s212 + $0x1f8] sm:$0xff]
        %v316 = vld [vmem:[#allocation6] sm:$0xff]
        %v317 = vld [vmem:[#allocation6 + $0x8] sm:$0xff]
        %v318 = vand.u32 %v253, 4294901760
        %319 = vmatprep.subr.mxu0 %v318
        %v320 = vand.u32 %v252, 4294901760
        %321 = vmatpush1.xpose.msra.mxu0 %v320
        %v322 = vand.u32 %v255, 4294901760
        %323 = vmatprep.subr.mxu0 %v322
        %v324 = vand.u32 %v254, 4294901760
        %325 = vmatpush1.xpose.msra.mxu0 %v324
        %v326 = vand.u32 %v257, 4294901760
        %327 = vmatprep.subr.mxu0 %v326
        %v328 = vand.u32 %v256, 4294901760
        %329 = vmatpush1.xpose.msra.mxu0 %v328
        %v330 = vand.u32 %v259, 4294901760
        %331 = vmatprep.subr.mxu0 %v330
        %v332 = vand.u32 %v258, 4294901760
        %333 = vmatpush1.xpose.msra.mxu0 %v332
        %v334 = vand.u32 %v261, 4294901760
        %335 = vmatprep.subr.mxu0 %v334
        %v336 = vand.u32 %v260, 4294901760
        %337 = vmatpush1.xpose.msra.mxu0 %v336
        %v338 = vand.u32 %v263, 4294901760
        %339 = vmatprep.subr.mxu0 %v338
        %v340 = vand.u32 %v262, 4294901760
        %341 = vmatpush1.xpose.msra.mxu0 %v340
        %v342 = vand.u32 %v265, 4294901760
        %343 = vmatprep.subr.mxu0 %v342
        %v344 = vand.u32 %v264, 4294901760
        %345 = vmatpush1.xpose.msra.mxu0 %v344
        %v346 = vand.u32 %v267, 4294901760
        %347 = vmatprep.subr.mxu0 %v346
        %v348 = vand.u32 %v266, 4294901760
        %349 = vmatpush1.xpose.msra.mxu0 %v348
        %v350 = vand.u32 %v269, 4294901760
        %351 = vmatprep.subr.mxu0 %v350
        %v352 = vand.u32 %v268, 4294901760
        %353 = vmatpush1.xpose.msra.mxu0 %v352
        %v354 = vand.u32 %v271, 4294901760
        %355 = vmatprep.subr.mxu0 %v354
        %v356 = vand.u32 %v270, 4294901760
        %357 = vmatpush1.xpose.msra.mxu0 %v356
        %v358 = vand.u32 %v273, 4294901760
        %359 = vmatprep.subr.mxu0 %v358
        %v360 = vand.u32 %v272, 4294901760
        %361 = vmatpush1.xpose.msra.mxu0 %v360
        %v362 = vand.u32 %v275, 4294901760
        %363 = vmatprep.subr.mxu0 %v362
        %v364 = vand.u32 %v274, 4294901760
        %365 = vmatpush1.xpose.msra.mxu0 %v364
        %v366 = vand.u32 %v277, 4294901760
        %367 = vmatprep.subr.mxu0 %v366
        %v368 = vand.u32 %v276, 4294901760
        %369 = vmatpush1.xpose.msra.mxu0 %v368
        %v370 = vand.u32 %v279, 4294901760
        %371 = vmatprep.subr.mxu0 %v370
        %v372 = vand.u32 %v278, 4294901760
        %373 = vmatpush1.xpose.msra.mxu0 %v372
        %v374 = vand.u32 %v281, 4294901760
        %375 = vmatprep.subr.mxu0 %v374
        %v376 = vand.u32 %v280, 4294901760
        %377 = vmatpush1.xpose.msra.mxu0 %v376
        %v378 = vand.u32 %v283, 4294901760
        %379 = vmatprep.subr.mxu0 %v378
        %v380 = vand.u32 %v282, 4294901760
        %381 = vmatpush1.xpose.msra.mxu0 %v380
        %v382 = vand.u32 %v285, 4294901760
        %383 = vmatprep.subr.mxu0 %v382
        %v384 = vand.u32 %v284, 4294901760
        %385 = vmatpush1.xpose.msra.mxu0 %v384
        %v386 = vand.u32 %v287, 4294901760
        %387 = vmatprep.subr.mxu0 %v386
        %v388 = vand.u32 %v286, 4294901760
        %389 = vmatpush1.xpose.msra.mxu0 %v388
        %v390 = vand.u32 %v289, 4294901760
        %391 = vmatprep.subr.mxu0 %v390
        %v392 = vand.u32 %v288, 4294901760
        %393 = vmatpush1.xpose.msra.mxu0 %v392
        %v394 = vand.u32 %v291, 4294901760
        %395 = vmatprep.subr.mxu0 %v394
        %v396 = vand.u32 %v290, 4294901760
        %397 = vmatpush1.xpose.msra.mxu0 %v396
        %v398 = vand.u32 %v293, 4294901760
        %399 = vmatprep.subr.mxu0 %v398
        %v400 = vand.u32 %v292, 4294901760
        %401 = vmatpush1.xpose.msra.mxu0 %v400
        %v402 = vand.u32 %v295, 4294901760
        %403 = vmatprep.subr.mxu0 %v402
        %v404 = vand.u32 %v294, 4294901760
        %405 = vmatpush1.xpose.msra.mxu0 %v404
        %v406 = vand.u32 %v297, 4294901760
        %407 = vmatprep.subr.mxu0 %v406
        %v408 = vand.u32 %v296, 4294901760
        %409 = vmatpush1.xpose.msra.mxu0 %v408
        %v410 = vand.u32 %v299, 4294901760
        %411 = vmatprep.subr.mxu0 %v410
        %v412 = vand.u32 %v298, 4294901760
        %413 = vmatpush1.xpose.msra.mxu0 %v412
        %v414 = vand.u32 %v301, 4294901760
        %415 = vmatprep.subr.mxu0 %v414
        %v416 = vand.u32 %v300, 4294901760
        %417 = vmatpush1.xpose.msra.mxu0 %v416
        %v418 = vand.u32 %v303, 4294901760
        %419 = vmatprep.subr.mxu0 %v418
        %v420 = vand.u32 %v302, 4294901760
        %421 = vmatpush1.xpose.msra.mxu0 %v420
        %v422 = vand.u32 %v305, 4294901760
        %423 = vmatprep.subr.mxu0 %v422
        %v424 = vand.u32 %v304, 4294901760
        %425 = vmatpush1.xpose.msra.mxu0 %v424
        %v426 = vand.u32 %v307, 4294901760
        %427 = vmatprep.subr.mxu0 %v426
        %v428 = vand.u32 %v306, 4294901760
        %429 = vmatpush1.xpose.msra.mxu0 %v428
        %v430 = vand.u32 %v309, 4294901760
        %431 = vmatprep.subr.mxu0 %v430
        %v432 = vand.u32 %v308, 4294901760
        %433 = vmatpush1.xpose.msra.mxu0 %v432
        %v434 = vand.u32 %v311, 4294901760
        %435 = vmatprep.subr.mxu0 %v434
        %v436 = vand.u32 %v310, 4294901760
        %437 = vmatpush1.xpose.msra.mxu0 %v436
        %v438 = vand.u32 %v313, 4294901760
        %439 = vmatprep.subr.mxu0 %v438
        %v440 = vand.u32 %v312, 4294901760
        %441 = vmatpush1.xpose.msra.mxu0 %v440
        %v442 = vand.u32 %v315, 4294901760
        %443 = vmatprep.subr.mxu0 %v442
        %v444 = vand.u32 %v314, 4294901760
        %445 = vmatpush1.xpose.msra.mxu0 %v444
        %v446 = vand.u32 %v317, 4294901760
        %v447 = vsub.f32 %v317, %v446
        %v448 = vand.u32 %v447, 4294901760
        %v449 = vsub.f32 %v447, %v448
        %v450 = vand.u32 %v449, 4294901760
        %451 = vmatprep.mubr.f32.mxu0 %v450
        %v452 = vand.u32 %v316, 4294901760
        %v453 = vsub.f32 %v316, %v452
        %v454 = vand.u32 %v453, 4294901760
        %v455 = vsub.f32 %v453, %v454
        %v456 = vand.u32 %v455, 4294901760
        %457 = vmatmul.mubr.f32.gmra.mrb[0].mxu0 %v456
        %v458 = vpop.f32.mrb[0].mxu0
        %v459 = vadd.f32 0.0, %v458
        %v460 = vpop.f32.mrb[0].mxu0
        %v461 = vadd.f32 0.0, %v460
        %462 = vdwg.mxu0
        %v463 = vand.u32 %v253, 4294901760
        %v464 = vsub.f32 %v253, %v463
        %v465 = vand.u32 %v464, 4294901760
        %v466 = vsub.f32 %v464, %v465
        %v467 = vand.u32 %v466, 4294901760
        %468 = vmatprep.subr.mxu0 %v467
        %v469 = vand.u32 %v252, 4294901760
        %v470 = vsub.f32 %v252, %v469
        %v471 = vand.u32 %v470, 4294901760
        %v472 = vsub.f32 %v470, %v471
        %v473 = vand.u32 %v472, 4294901760
        %474 = vmatpush1.xpose.msra.mxu0 %v473
        %v475 = vand.u32 %v255, 4294901760
        %v476 = vsub.f32 %v255, %v475
        %v477 = vand.u32 %v476, 4294901760
        %v478 = vsub.f32 %v476, %v477
        %v479 = vand.u32 %v478, 4294901760
        %480 = vmatprep.subr.mxu0 %v479
        %v481 = vand.u32 %v254, 4294901760
        %v482 = vsub.f32 %v254, %v481
        %v483 = vand.u32 %v482, 4294901760
        %v484 = vsub.f32 %v482, %v483
        %v485 = vand.u32 %v484, 4294901760
        %486 = vmatpush1.xpose.msra.mxu0 %v485
        %v487 = vand.u32 %v257, 4294901760
        %v488 = vsub.f32 %v257, %v487
        %v489 = vand.u32 %v488, 4294901760
        %v490 = vsub.f32 %v488, %v489
        %v491 = vand.u32 %v490, 4294901760
        %492 = vmatprep.subr.mxu0 %v491
        %v493 = vand.u32 %v256, 4294901760
        %v494 = vsub.f32 %v256, %v493
        %v495 = vand.u32 %v494, 4294901760
        %v496 = vsub.f32 %v494, %v495
        %v497 = vand.u32 %v496, 4294901760
        %498 = vmatpush1.xpose.msra.mxu0 %v497
        %v499 = vand.u32 %v259, 4294901760
        %v500 = vsub.f32 %v259, %v499
        %v501 = vand.u32 %v500, 4294901760
        %v502 = vsub.f32 %v500, %v501
        %v503 = vand.u32 %v502, 4294901760
        %504 = vmatprep.subr.mxu0 %v503
        %v505 = vand.u32 %v258, 4294901760
        %v506 = vsub.f32 %v258, %v505
        %v507 = vand.u32 %v506, 4294901760
        %v508 = vsub.f32 %v506, %v507
        %v509 = vand.u32 %v508, 4294901760
        %510 = vmatpush1.xpose.msra.mxu0 %v509
        %v511 = vand.u32 %v261, 4294901760
        %v512 = vsub.f32 %v261, %v511
        %v513 = vand.u32 %v512, 4294901760
        %v514 = vsub.f32 %v512, %v513
        %v515 = vand.u32 %v514, 4294901760
        %516 = vmatprep.subr.mxu0 %v515
        %v517 = vand.u32 %v260, 4294901760
        %v518 = vsub.f32 %v260, %v517
        %v519 = vand.u32 %v518, 4294901760
        %v520 = vsub.f32 %v518, %v519
        %v521 = vand.u32 %v520, 4294901760
        %522 = vmatpush1.xpose.msra.mxu0 %v521
        %v523 = vand.u32 %v263, 4294901760
        %v524 = vsub.f32 %v263, %v523
        %v525 = vand.u32 %v524, 4294901760
        %v526 = vsub.f32 %v524, %v525
        %v527 = vand.u32 %v526, 4294901760
        %528 = vmatprep.subr.mxu0 %v527
        %v529 = vand.u32 %v262, 4294901760
        %v530 = vsub.f32 %v262, %v529
        %v531 = vand.u32 %v530, 4294901760
        %v532 = vsub.f32 %v530, %v531
        %v533 = vand.u32 %v532, 4294901760
        %534 = vmatpush1.xpose.msra.mxu0 %v533
        %v535 = vand.u32 %v265, 4294901760
        %v536 = vsub.f32 %v265, %v535
        %v537 = vand.u32 %v536, 4294901760
        %v538 = vsub.f32 %v536, %v537
        %v539 = vand.u32 %v538, 4294901760
        %540 = vmatprep.subr.mxu0 %v539
        %v541 = vand.u32 %v264, 4294901760
        %v542 = vsub.f32 %v264, %v541
        %v543 = vand.u32 %v542, 4294901760
        %v544 = vsub.f32 %v542, %v543
        %v545 = vand.u32 %v544, 4294901760
        %546 = vmatpush1.xpose.msra.mxu0 %v545
        %v547 = vand.u32 %v267, 4294901760
        %v548 = vsub.f32 %v267, %v547
        %v549 = vand.u32 %v548, 4294901760
        %v550 = vsub.f32 %v548, %v549
        %v551 = vand.u32 %v550, 4294901760
        %552 = vmatprep.subr.mxu0 %v551
        %v553 = vand.u32 %v266, 4294901760
        %v554 = vsub.f32 %v266, %v553
        %v555 = vand.u32 %v554, 4294901760
        %v556 = vsub.f32 %v554, %v555
        %v557 = vand.u32 %v556, 4294901760
        %558 = vmatpush1.xpose.msra.mxu0 %v557
        %v559 = vand.u32 %v269, 4294901760
        %v560 = vsub.f32 %v269, %v559
        %v561 = vand.u32 %v560, 4294901760
        %v562 = vsub.f32 %v560, %v561
        %v563 = vand.u32 %v562, 4294901760
        %564 = vmatprep.subr.mxu0 %v563
        %v565 = vand.u32 %v268, 4294901760
        %v566 = vsub.f32 %v268, %v565
        %v567 = vand.u32 %v566, 4294901760
        %v568 = vsub.f32 %v566, %v567
        %v569 = vand.u32 %v568, 4294901760
        %570 = vmatpush1.xpose.msra.mxu0 %v569
        %v571 = vand.u32 %v271, 4294901760
        %v572 = vsub.f32 %v271, %v571
        %v573 = vand.u32 %v572, 4294901760
        %v574 = vsub.f32 %v572, %v573
        %v575 = vand.u32 %v574, 4294901760
        %576 = vmatprep.subr.mxu0 %v575
        %v577 = vand.u32 %v270, 4294901760
        %v578 = vsub.f32 %v270, %v577
        %v579 = vand.u32 %v578, 4294901760
        %v580 = vsub.f32 %v578, %v579
        %v581 = vand.u32 %v580, 4294901760
        %582 = vmatpush1.xpose.msra.mxu0 %v581
        %v583 = vand.u32 %v273, 4294901760
        %v584 = vsub.f32 %v273, %v583
        %v585 = vand.u32 %v584, 4294901760
        %v586 = vsub.f32 %v584, %v585
        %v587 = vand.u32 %v586, 4294901760
        %588 = vmatprep.subr.mxu0 %v587
        %v589 = vand.u32 %v272, 4294901760
        %v590 = vsub.f32 %v272, %v589
        %v591 = vand.u32 %v590, 4294901760
        %v592 = vsub.f32 %v590, %v591
        %v593 = vand.u32 %v592, 4294901760
        %594 = vmatpush1.xpose.msra.mxu0 %v593
        %v595 = vand.u32 %v275, 4294901760
        %v596 = vsub.f32 %v275, %v595
        %v597 = vand.u32 %v596, 4294901760
        %v598 = vsub.f32 %v596, %v597
        %v599 = vand.u32 %v598, 4294901760
        %600 = vmatprep.subr.mxu0 %v599
        %v601 = vand.u32 %v274, 4294901760
        %v602 = vsub.f32 %v274, %v601
        %v603 = vand.u32 %v602, 4294901760
        %v604 = vsub.f32 %v602, %v603
        %v605 = vand.u32 %v604, 4294901760
        %606 = vmatpush1.xpose.msra.mxu0 %v605
        %v607 = vand.u32 %v277, 4294901760
        %v608 = vsub.f32 %v277, %v607
        %v609 = vand.u32 %v608, 4294901760
        %v610 = vsub.f32 %v608, %v609
        %v611 = vand.u32 %v610, 4294901760
        %612 = vmatprep.subr.mxu0 %v611
        %v613 = vand.u32 %v276, 4294901760
        %v614 = vsub.f32 %v276, %v613
        %v615 = vand.u32 %v614, 4294901760
        %v616 = vsub.f32 %v614, %v615
        %v617 = vand.u32 %v616, 4294901760
        %618 = vmatpush1.xpose.msra.mxu0 %v617
        %v619 = vand.u32 %v279, 4294901760
        %v620 = vsub.f32 %v279, %v619
        %v621 = vand.u32 %v620, 4294901760
        %v622 = vsub.f32 %v620, %v621
        %v623 = vand.u32 %v622, 4294901760
        %624 = vmatprep.subr.mxu0 %v623
        %v625 = vand.u32 %v278, 4294901760
        %v626 = vsub.f32 %v278, %v625
        %v627 = vand.u32 %v626, 4294901760
        %v628 = vsub.f32 %v626, %v627
        %v629 = vand.u32 %v628, 4294901760
        %630 = vmatpush1.xpose.msra.mxu0 %v629
        %v631 = vand.u32 %v281, 4294901760
        %v632 = vsub.f32 %v281, %v631
        %v633 = vand.u32 %v632, 4294901760
        %v634 = vsub.f32 %v632, %v633
        %v635 = vand.u32 %v634, 4294901760
        %636 = vmatprep.subr.mxu0 %v635
        %v637 = vand.u32 %v280, 4294901760
        %v638 = vsub.f32 %v280, %v637
        %v639 = vand.u32 %v638, 4294901760
        %v640 = vsub.f32 %v638, %v639
        %v641 = vand.u32 %v640, 4294901760
        %642 = vmatpush1.xpose.msra.mxu0 %v641
        %v643 = vand.u32 %v283, 4294901760
        %v644 = vsub.f32 %v283, %v643
        %v645 = vand.u32 %v644, 4294901760
        %v646 = vsub.f32 %v644, %v645
        %v647 = vand.u32 %v646, 4294901760
        %648 = vmatprep.subr.mxu0 %v647
        %v649 = vand.u32 %v282, 4294901760
        %v650 = vsub.f32 %v282, %v649
        %v651 = vand.u32 %v650, 4294901760
        %v652 = vsub.f32 %v650, %v651
        %v653 = vand.u32 %v652, 4294901760
        %654 = vmatpush1.xpose.msra.mxu0 %v653
        %v655 = vand.u32 %v285, 4294901760
        %v656 = vsub.f32 %v285, %v655
        %v657 = vand.u32 %v656, 4294901760
        %v658 = vsub.f32 %v656, %v657
        %v659 = vand.u32 %v658, 4294901760
        %660 = vmatprep.subr.mxu0 %v659
        %v661 = vand.u32 %v284, 4294901760
        %v662 = vsub.f32 %v284, %v661
        %v663 = vand.u32 %v662, 4294901760
        %v664 = vsub.f32 %v662, %v663
        %v665 = vand.u32 %v664, 4294901760
        %666 = vmatpush1.xpose.msra.mxu0 %v665
        %v667 = vand.u32 %v287, 4294901760
        %v668 = vsub.f32 %v287, %v667
        %v669 = vand.u32 %v668, 4294901760
        %v670 = vsub.f32 %v668, %v669
        %v671 = vand.u32 %v670, 4294901760
        %672 = vmatprep.subr.mxu0 %v671
        %v673 = vand.u32 %v286, 4294901760
        %v674 = vsub.f32 %v286, %v673
        %v675 = vand.u32 %v674, 4294901760
        %v676 = vsub.f32 %v674, %v675
        %v677 = vand.u32 %v676, 4294901760
        %678 = vmatpush1.xpose.msra.mxu0 %v677
        %v679 = vand.u32 %v289, 4294901760
        %v680 = vsub.f32 %v289, %v679
        %v681 = vand.u32 %v680, 4294901760
        %v682 = vsub.f32 %v680, %v681
        %v683 = vand.u32 %v682, 4294901760
        %684 = vmatprep.subr.mxu0 %v683
        %v685 = vand.u32 %v288, 4294901760
        %v686 = vsub.f32 %v288, %v685
        %v687 = vand.u32 %v686, 4294901760
        %v688 = vsub.f32 %v686, %v687
        %v689 = vand.u32 %v688, 4294901760
        %690 = vmatpush1.xpose.msra.mxu0 %v689
        %v691 = vand.u32 %v291, 4294901760
        %v692 = vsub.f32 %v291, %v691
        %v693 = vand.u32 %v692, 4294901760
        %v694 = vsub.f32 %v692, %v693
        %v695 = vand.u32 %v694, 4294901760
        %696 = vmatprep.subr.mxu0 %v695
        %v697 = vand.u32 %v290, 4294901760
        %v698 = vsub.f32 %v290, %v697
        %v699 = vand.u32 %v698, 4294901760
        %v700 = vsub.f32 %v698, %v699
        %v701 = vand.u32 %v700, 4294901760
        %702 = vmatpush1.xpose.msra.mxu0 %v701
        %v703 = vand.u32 %v293, 4294901760
        %v704 = vsub.f32 %v293, %v703
        %v705 = vand.u32 %v704, 4294901760
        %v706 = vsub.f32 %v704, %v705
        %v707 = vand.u32 %v706, 4294901760
        %708 = vmatprep.subr.mxu0 %v707
        %v709 = vand.u32 %v292, 4294901760
        %v710 = vsub.f32 %v292, %v709
        %v711 = vand.u32 %v710, 4294901760
        %v712 = vsub.f32 %v710, %v711
        %v713 = vand.u32 %v712, 4294901760
        %714 = vmatpush1.xpose.msra.mxu0 %v713
        %v715 = vand.u32 %v295, 4294901760
        %v716 = vsub.f32 %v295, %v715
        %v717 = vand.u32 %v716, 4294901760
        %v718 = vsub.f32 %v716, %v717
        %v719 = vand.u32 %v718, 4294901760
        %720 = vmatprep.subr.mxu0 %v719
        %v721 = vand.u32 %v294, 4294901760
        %v722 = vsub.f32 %v294, %v721
        %v723 = vand.u32 %v722, 4294901760
        %v724 = vsub.f32 %v722, %v723
        %v725 = vand.u32 %v724, 4294901760
        %726 = vmatpush1.xpose.msra.mxu0 %v725
        %v727 = vand.u32 %v297, 4294901760
        %v728 = vsub.f32 %v297, %v727
        %v729 = vand.u32 %v728, 4294901760
        %v730 = vsub.f32 %v728, %v729
        %v731 = vand.u32 %v730, 4294901760
        %732 = vmatprep.subr.mxu0 %v731
        %v733 = vand.u32 %v296, 4294901760
        %v734 = vsub.f32 %v296, %v733
        %v735 = vand.u32 %v734, 4294901760
        %v736 = vsub.f32 %v734, %v735
        %v737 = vand.u32 %v736, 4294901760
        %738 = vmatpush1.xpose.msra.mxu0 %v737
        %v739 = vand.u32 %v299, 4294901760
        %v740 = vsub.f32 %v299, %v739
        %v741 = vand.u32 %v740, 4294901760
        %v742 = vsub.f32 %v740, %v741
        %v743 = vand.u32 %v742, 4294901760
        %744 = vmatprep.subr.mxu0 %v743
        %v745 = vand.u32 %v298, 4294901760
        %v746 = vsub.f32 %v298, %v745
        %v747 = vand.u32 %v746, 4294901760
        %v748 = vsub.f32 %v746, %v747
        %v749 = vand.u32 %v748, 4294901760
        %750 = vmatpush1.xpose.msra.mxu0 %v749
        %v751 = vand.u32 %v301, 4294901760
        %v752 = vsub.f32 %v301, %v751
        %v753 = vand.u32 %v752, 4294901760
        %v754 = vsub.f32 %v752, %v753
        %v755 = vand.u32 %v754, 4294901760
        %756 = vmatprep.subr.mxu0 %v755
        %v757 = vand.u32 %v300, 4294901760
        %v758 = vsub.f32 %v300, %v757
        %v759 = vand.u32 %v758, 4294901760
        %v760 = vsub.f32 %v758, %v759
        %v761 = vand.u32 %v760, 4294901760
        %762 = vmatpush1.xpose.msra.mxu0 %v761
        %v763 = vand.u32 %v303, 4294901760
        %v764 = vsub.f32 %v303, %v763
        %v765 = vand.u32 %v764, 4294901760
        %v766 = vsub.f32 %v764, %v765
        %v767 = vand.u32 %v766, 4294901760
        %768 = vmatprep.subr.mxu0 %v767
        %v769 = vand.u32 %v302, 4294901760
        %v770 = vsub.f32 %v302, %v769
        %v771 = vand.u32 %v770, 4294901760
        %v772 = vsub.f32 %v770, %v771
        %v773 = vand.u32 %v772, 4294901760
        %774 = vmatpush1.xpose.msra.mxu0 %v773
        %v775 = vand.u32 %v305, 4294901760
        %v776 = vsub.f32 %v305, %v775
        %v777 = vand.u32 %v776, 4294901760
        %v778 = vsub.f32 %v776, %v777
        %v779 = vand.u32 %v778, 4294901760
        %780 = vmatprep.subr.mxu0 %v779
        %v781 = vand.u32 %v304, 4294901760
        %v782 = vsub.f32 %v304, %v781
        %v783 = vand.u32 %v782, 4294901760
        %v784 = vsub.f32 %v782, %v783
        %v785 = vand.u32 %v784, 4294901760
        %786 = vmatpush1.xpose.msra.mxu0 %v785
        %v787 = vand.u32 %v307, 4294901760
        %v788 = vsub.f32 %v307, %v787
        %v789 = vand.u32 %v788, 4294901760
        %v790 = vsub.f32 %v788, %v789
        %v791 = vand.u32 %v790, 4294901760
        %792 = vmatprep.subr.mxu0 %v791
        %v793 = vand.u32 %v306, 4294901760
        %v794 = vsub.f32 %v306, %v793
        %v795 = vand.u32 %v794, 4294901760
        %v796 = vsub.f32 %v794, %v795
        %v797 = vand.u32 %v796, 4294901760
        %798 = vmatpush1.xpose.msra.mxu0 %v797
        %v799 = vand.u32 %v309, 4294901760
        %v800 = vsub.f32 %v309, %v799
        %v801 = vand.u32 %v800, 4294901760
        %v802 = vsub.f32 %v800, %v801
        %v803 = vand.u32 %v802, 4294901760
        %804 = vmatprep.subr.mxu0 %v803
        %v805 = vand.u32 %v308, 4294901760
        %v806 = vsub.f32 %v308, %v805
        %v807 = vand.u32 %v806, 4294901760
        %v808 = vsub.f32 %v806, %v807
        %v809 = vand.u32 %v808, 4294901760
        %810 = vmatpush1.xpose.msra.mxu0 %v809
        %v811 = vand.u32 %v311, 4294901760
        %v812 = vsub.f32 %v311, %v811
        %v813 = vand.u32 %v812, 4294901760
        %v814 = vsub.f32 %v812, %v813
        %v815 = vand.u32 %v814, 4294901760
        %816 = vmatprep.subr.mxu0 %v815
        %v817 = vand.u32 %v310, 4294901760
        %v818 = vsub.f32 %v310, %v817
        %v819 = vand.u32 %v818, 4294901760
        %v820 = vsub.f32 %v818, %v819
        %v821 = vand.u32 %v820, 4294901760
        %822 = vmatpush1.xpose.msra.mxu0 %v821
        %v823 = vand.u32 %v313, 4294901760
        %v824 = vsub.f32 %v313, %v823
        %v825 = vand.u32 %v824, 4294901760
        %v826 = vsub.f32 %v824, %v825
        %v827 = vand.u32 %v826, 4294901760
        %828 = vmatprep.subr.mxu0 %v827
        %v829 = vand.u32 %v312, 4294901760
        %v830 = vsub.f32 %v312, %v829
        %v831 = vand.u32 %v830, 4294901760
        %v832 = vsub.f32 %v830, %v831
        %v833 = vand.u32 %v832, 4294901760
        %834 = vmatpush1.xpose.msra.mxu0 %v833
        %v835 = vand.u32 %v315, 4294901760
        %v836 = vsub.f32 %v315, %v835
        %v837 = vand.u32 %v836, 4294901760
        %v838 = vsub.f32 %v836, %v837
        %v839 = vand.u32 %v838, 4294901760
        %840 = vmatprep.subr.mxu0 %v839
        %v841 = vand.u32 %v314, 4294901760
        %v842 = vsub.f32 %v314, %v841
        %v843 = vand.u32 %v842, 4294901760
        %v844 = vsub.f32 %v842, %v843
        %v845 = vand.u32 %v844, 4294901760
        %846 = vmatpush1.xpose.msra.mxu0 %v845
        %v847 = vand.u32 %v317, 4294901760
        %848 = vmatprep.mubr.f32.mxu0 %v847
        %v849 = vand.u32 %v316, 4294901760
        %850 = vmatmul.mubr.f32.gmra.mrb[0].mxu0 %v849
        %v851 = vpop.f32.mrb[0].mxu0
        %v852 = vadd.f32 %v459, %v851
        %v853 = vpop.f32.mrb[0].mxu0
        %v854 = vadd.f32 %v461, %v853
        %855 = vdwg.mxu0
        %v856 = vand.u32 %v253, 4294901760
        %v857 = vsub.f32 %v253, %v856
        %858 = vmatprep.subr.mxu0 %v857
        %v859 = vand.u32 %v252, 4294901760
        %v860 = vsub.f32 %v252, %v859
        %861 = vmatpush1.xpose.msra.mxu0 %v860
        %v862 = vand.u32 %v255, 4294901760
        %v863 = vsub.f32 %v255, %v862
        %864 = vmatprep.subr.mxu0 %v863
        %v865 = vand.u32 %v254, 4294901760
        %v866 = vsub.f32 %v254, %v865
        %867 = vmatpush1.xpose.msra.mxu0 %v866
        %v868 = vand.u32 %v257, 4294901760
        %v869 = vsub.f32 %v257, %v868
        %870 = vmatprep.subr.mxu0 %v869
        %v871 = vand.u32 %v256, 4294901760
        %v872 = vsub.f32 %v256, %v871
        %873 = vmatpush1.xpose.msra.mxu0 %v872
        %v874 = vand.u32 %v259, 4294901760
        %v875 = vsub.f32 %v259, %v874
        %876 = vmatprep.subr.mxu0 %v875
        %v877 = vand.u32 %v258, 4294901760
        %v878 = vsub.f32 %v258, %v877
        %879 = vmatpush1.xpose.msra.mxu0 %v878
        %v880 = vand.u32 %v261, 4294901760
        %v881 = vsub.f32 %v261, %v880
        %882 = vmatprep.subr.mxu0 %v881
        %v883 = vand.u32 %v260, 4294901760
        %v884 = vsub.f32 %v260, %v883
        %885 = vmatpush1.xpose.msra.mxu0 %v884
        %v886 = vand.u32 %v263, 4294901760
        %v887 = vsub.f32 %v263, %v886
        %888 = vmatprep.subr.mxu0 %v887
        %v889 = vand.u32 %v262, 4294901760
        %v890 = vsub.f32 %v262, %v889
        %891 = vmatpush1.xpose.msra.mxu0 %v890
        %v892 = vand.u32 %v265, 4294901760
        %v893 = vsub.f32 %v265, %v892
        %894 = vmatprep.subr.mxu0 %v893
        %v895 = vand.u32 %v264, 4294901760
        %v896 = vsub.f32 %v264, %v895
        %897 = vmatpush1.xpose.msra.mxu0 %v896
        %v898 = vand.u32 %v267, 4294901760
        %v899 = vsub.f32 %v267, %v898
        %900 = vmatprep.subr.mxu0 %v899
        %v901 = vand.u32 %v266, 4294901760
        %v902 = vsub.f32 %v266, %v901
        %903 = vmatpush1.xpose.msra.mxu0 %v902
        %v904 = vand.u32 %v269, 4294901760
        %v905 = vsub.f32 %v269, %v904
        %906 = vmatprep.subr.mxu0 %v905
        %v907 = vand.u32 %v268, 4294901760
        %v908 = vsub.f32 %v268, %v907
        %909 = vmatpush1.xpose.msra.mxu0 %v908
        %v910 = vand.u32 %v271, 4294901760
        %v911 = vsub.f32 %v271, %v910
        %912 = vmatprep.subr.mxu0 %v911
        %v913 = vand.u32 %v270, 4294901760
        %v914 = vsub.f32 %v270, %v913
        %915 = vmatpush1.xpose.msra.mxu0 %v914
        %v916 = vand.u32 %v273, 4294901760
        %v917 = vsub.f32 %v273, %v916
        %918 = vmatprep.subr.mxu0 %v917
        %v919 = vand.u32 %v272, 4294901760
        %v920 = vsub.f32 %v272, %v919
        %921 = vmatpush1.xpose.msra.mxu0 %v920
        %v922 = vand.u32 %v275, 4294901760
        %v923 = vsub.f32 %v275, %v922
        %924 = vmatprep.subr.mxu0 %v923
        %v925 = vand.u32 %v274, 4294901760
        %v926 = vsub.f32 %v274, %v925
        %927 = vmatpush1.xpose.msra.mxu0 %v926
        %v928 = vand.u32 %v277, 4294901760
        %v929 = vsub.f32 %v277, %v928
        %930 = vmatprep.subr.mxu0 %v929
        %v931 = vand.u32 %v276, 4294901760
        %v932 = vsub.f32 %v276, %v931
        %933 = vmatpush1.xpose.msra.mxu0 %v932
        %v934 = vand.u32 %v279, 4294901760
        %v935 = vsub.f32 %v279, %v934
        %936 = vmatprep.subr.mxu0 %v935
        %v937 = vand.u32 %v278, 4294901760
        %v938 = vsub.f32 %v278, %v937
        %939 = vmatpush1.xpose.msra.mxu0 %v938
        %v940 = vand.u32 %v281, 4294901760
        %v941 = vsub.f32 %v281, %v940
        %942 = vmatprep.subr.mxu0 %v941
        %v943 = vand.u32 %v280, 4294901760
        %v944 = vsub.f32 %v280, %v943
        %945 = vmatpush1.xpose.msra.mxu0 %v944
        %v946 = vand.u32 %v283, 4294901760
        %v947 = vsub.f32 %v283, %v946
        %948 = vmatprep.subr.mxu0 %v947
        %v949 = vand.u32 %v282, 4294901760
        %v950 = vsub.f32 %v282, %v949
        %951 = vmatpush1.xpose.msra.mxu0 %v950
        %v952 = vand.u32 %v285, 4294901760
        %v953 = vsub.f32 %v285, %v952
        %954 = vmatprep.subr.mxu0 %v953
        %v955 = vand.u32 %v284, 4294901760
        %v956 = vsub.f32 %v284, %v955
        %957 = vmatpush1.xpose.msra.mxu0 %v956
        %v958 = vand.u32 %v287, 4294901760
        %v959 = vsub.f32 %v287, %v958
        %960 = vmatprep.subr.mxu0 %v959
        %v961 = vand.u32 %v286, 4294901760
        %v962 = vsub.f32 %v286, %v961
        %963 = vmatpush1.xpose.msra.mxu0 %v962
        %v964 = vand.u32 %v289, 4294901760
        %v965 = vsub.f32 %v289, %v964
        %966 = vmatprep.subr.mxu0 %v965
        %v967 = vand.u32 %v288, 4294901760
        %v968 = vsub.f32 %v288, %v967
        %969 = vmatpush1.xpose.msra.mxu0 %v968
        %v970 = vand.u32 %v291, 4294901760
        %v971 = vsub.f32 %v291, %v970
        %972 = vmatprep.subr.mxu0 %v971
        %v973 = vand.u32 %v290, 4294901760
        %v974 = vsub.f32 %v290, %v973
        %975 = vmatpush1.xpose.msra.mxu0 %v974
        %v976 = vand.u32 %v293, 4294901760
        %v977 = vsub.f32 %v293, %v976
        %978 = vmatprep.subr.mxu0 %v977
        %v979 = vand.u32 %v292, 4294901760
        %v980 = vsub.f32 %v292, %v979
        %981 = vmatpush1.xpose.msra.mxu0 %v980
        %v982 = vand.u32 %v295, 4294901760
        %v983 = vsub.f32 %v295, %v982
        %984 = vmatprep.subr.mxu0 %v983
        %v985 = vand.u32 %v294, 4294901760
        %v986 = vsub.f32 %v294, %v985
        %987 = vmatpush1.xpose.msra.mxu0 %v986
        %v988 = vand.u32 %v297, 4294901760
        %v989 = vsub.f32 %v297, %v988
        %990 = vmatprep.subr.mxu0 %v989
        %v991 = vand.u32 %v296, 4294901760
        %v992 = vsub.f32 %v296, %v991
        %993 = vmatpush1.xpose.msra.mxu0 %v992
        %v994 = vand.u32 %v299, 4294901760
        %v995 = vsub.f32 %v299, %v994
        %996 = vmatprep.subr.mxu0 %v995
        %v997 = vand.u32 %v298, 4294901760
        %v998 = vsub.f32 %v298, %v997
        %999 = vmatpush1.xpose.msra.mxu0 %v998
        %v1000 = vand.u32 %v301, 4294901760
        %v1001 = vsub.f32 %v301, %v1000
        %1002 = vmatprep.subr.mxu0 %v1001
        %v1003 = vand.u32 %v300, 4294901760
        %v1004 = vsub.f32 %v300, %v1003
        %1005 = vmatpush1.xpose.msra.mxu0 %v1004
        %v1006 = vand.u32 %v303, 4294901760
        %v1007 = vsub.f32 %v303, %v1006
        %1008 = vmatprep.subr.mxu0 %v1007
        %v1009 = vand.u32 %v302, 4294901760
        %v1010 = vsub.f32 %v302, %v1009
        %1011 = vmatpush1.xpose.msra.mxu0 %v1010
        %v1012 = vand.u32 %v305, 4294901760
        %v1013 = vsub.f32 %v305, %v1012
        %1014 = vmatprep.subr.mxu0 %v1013
        %v1015 = vand.u32 %v304, 4294901760
        %v1016 = vsub.f32 %v304, %v1015
        %1017 = vmatpush1.xpose.msra.mxu0 %v1016
        %v1018 = vand.u32 %v307, 4294901760
        %v1019 = vsub.f32 %v307, %v1018
        %1020 = vmatprep.subr.mxu0 %v1019
        %v1021 = vand.u32 %v306, 4294901760
        %v1022 = vsub.f32 %v306, %v1021
        %1023 = vmatpush1.xpose.msra.mxu0 %v1022
        %v1024 = vand.u32 %v309, 4294901760
        %v1025 = vsub.f32 %v309, %v1024
        %1026 = vmatprep.subr.mxu0 %v1025
        %v1027 = vand.u32 %v308, 4294901760
        %v1028 = vsub.f32 %v308, %v1027
        %1029 = vmatpush1.xpose.msra.mxu0 %v1028
        %v1030 = vand.u32 %v311, 4294901760
        %v1031 = vsub.f32 %v311, %v1030
        %1032 = vmatprep.subr.mxu0 %v1031
        %v1033 = vand.u32 %v310, 4294901760
        %v1034 = vsub.f32 %v310, %v1033
        %1035 = vmatpush1.xpose.msra.mxu0 %v1034
        %v1036 = vand.u32 %v313, 4294901760
        %v1037 = vsub.f32 %v313, %v1036
        %1038 = vmatprep.subr.mxu0 %v1037
        %v1039 = vand.u32 %v312, 4294901760
        %v1040 = vsub.f32 %v312, %v1039
        %1041 = vmatpush1.xpose.msra.mxu0 %v1040
        %v1042 = vand.u32 %v315, 4294901760
        %v1043 = vsub.f32 %v315, %v1042
        %1044 = vmatprep.subr.mxu0 %v1043
        %v1045 = vand.u32 %v314, 4294901760
        %v1046 = vsub.f32 %v314, %v1045
        %1047 = vmatpush1.xpose.msra.mxu0 %v1046
        %v1048 = vand.u32 %v317, 4294901760
        %v1049 = vsub.f32 %v317, %v1048
        %1050 = vmatprep.mubr.f32.mxu0 %v1049
        %v1051 = vand.u32 %v316, 4294901760
        %v1052 = vsub.f32 %v316, %v1051
        %1053 = vmatmul.mubr.f32.gmra.mrb[0].mxu0 %v1052
        %v1054 = vpop.f32.mrb[0].mxu0
        %v1055 = vadd.f32 %v852, %v1054
        %v1056 = vpop.f32.mrb[0].mxu0
        %v1057 = vadd.f32 %v854, %v1056
        %1058 = vdwg.mxu0
        %v1059 = vand.u32 %v253, 4294901760
        %1060 = vmatprep.subr.mxu0 %v1059
        %v1061 = vand.u32 %v252, 4294901760
        %1062 = vmatpush1.xpose.msra.mxu0 %v1061
        %v1063 = vand.u32 %v255, 4294901760
        %1064 = vmatprep.subr.mxu0 %v1063
        %v1065 = vand.u32 %v254, 4294901760
        %1066 = vmatpush1.xpose.msra.mxu0 %v1065
        %v1067 = vand.u32 %v257, 4294901760
        %1068 = vmatprep.subr.mxu0 %v1067
        %v1069 = vand.u32 %v256, 4294901760
        %1070 = vmatpush1.xpose.msra.mxu0 %v1069
        %v1071 = vand.u32 %v259, 4294901760
        %1072 = vmatprep.subr.mxu0 %v1071
        %v1073 = vand.u32 %v258, 4294901760
        %1074 = vmatpush1.xpose.msra.mxu0 %v1073
        %v1075 = vand.u32 %v261, 4294901760
        %1076 = vmatprep.subr.mxu0 %v1075
        %v1077 = vand.u32 %v260, 4294901760
        %1078 = vmatpush1.xpose.msra.mxu0 %v1077
        %v1079 = vand.u32 %v263, 4294901760
        %1080 = vmatprep.subr.mxu0 %v1079
        %v1081 = vand.u32 %v262, 4294901760
        %1082 = vmatpush1.xpose.msra.mxu0 %v1081
        %v1083 = vand.u32 %v265, 4294901760
        %1084 = vmatprep.subr.mxu0 %v1083
        %v1085 = vand.u32 %v264, 4294901760
        %1086 = vmatpush1.xpose.msra.mxu0 %v1085
        %v1087 = vand.u32 %v267, 4294901760
        %1088 = vmatprep.subr.mxu0 %v1087
        %v1089 = vand.u32 %v266, 4294901760
        %1090 = vmatpush1.xpose.msra.mxu0 %v1089
        %v1091 = vand.u32 %v269, 4294901760
        %1092 = vmatprep.subr.mxu0 %v1091
        %v1093 = vand.u32 %v268, 4294901760
        %1094 = vmatpush1.xpose.msra.mxu0 %v1093
        %v1095 = vand.u32 %v271, 4294901760
        %1096 = vmatprep.subr.mxu0 %v1095
        %v1097 = vand.u32 %v270, 4294901760
        %1098 = vmatpush1.xpose.msra.mxu0 %v1097
        %v1099 = vand.u32 %v273, 4294901760
        %1100 = vmatprep.subr.mxu0 %v1099
        %v1101 = vand.u32 %v272, 4294901760
        %1102 = vmatpush1.xpose.msra.mxu0 %v1101
        %v1103 = vand.u32 %v275, 4294901760
        %1104 = vmatprep.subr.mxu0 %v1103
        %v1105 = vand.u32 %v274, 4294901760
        %1106 = vmatpush1.xpose.msra.mxu0 %v1105
        %v1107 = vand.u32 %v277, 4294901760
        %1108 = vmatprep.subr.mxu0 %v1107
        %v1109 = vand.u32 %v276, 4294901760
        %1110 = vmatpush1.xpose.msra.mxu0 %v1109
        %v1111 = vand.u32 %v279, 4294901760
        %1112 = vmatprep.subr.mxu0 %v1111
        %v1113 = vand.u32 %v278, 4294901760
        %1114 = vmatpush1.xpose.msra.mxu0 %v1113
        %v1115 = vand.u32 %v281, 4294901760
        %1116 = vmatprep.subr.mxu0 %v1115
        %v1117 = vand.u32 %v280, 4294901760
        %1118 = vmatpush1.xpose.msra.mxu0 %v1117
        %v1119 = vand.u32 %v283, 4294901760
        %1120 = vmatprep.subr.mxu0 %v1119
        %v1121 = vand.u32 %v282, 4294901760
        %1122 = vmatpush1.xpose.msra.mxu0 %v1121
        %v1123 = vand.u32 %v285, 4294901760
        %1124 = vmatprep.subr.mxu0 %v1123
        %v1125 = vand.u32 %v284, 4294901760
        %1126 = vmatpush1.xpose.msra.mxu0 %v1125
        %v1127 = vand.u32 %v287, 4294901760
        %1128 = vmatprep.subr.mxu0 %v1127
        %v1129 = vand.u32 %v286, 4294901760
        %1130 = vmatpush1.xpose.msra.mxu0 %v1129
        %v1131 = vand.u32 %v289, 4294901760
        %1132 = vmatprep.subr.mxu0 %v1131
        %v1133 = vand.u32 %v288, 4294901760
        %1134 = vmatpush1.xpose.msra.mxu0 %v1133
        %v1135 = vand.u32 %v291, 4294901760
        %1136 = vmatprep.subr.mxu0 %v1135
        %v1137 = vand.u32 %v290, 4294901760
        %1138 = vmatpush1.xpose.msra.mxu0 %v1137
        %v1139 = vand.u32 %v293, 4294901760
        %1140 = vmatprep.subr.mxu0 %v1139
        %v1141 = vand.u32 %v292, 4294901760
        %1142 = vmatpush1.xpose.msra.mxu0 %v1141
        %v1143 = vand.u32 %v295, 4294901760
        %1144 = vmatprep.subr.mxu0 %v1143
        %v1145 = vand.u32 %v294, 4294901760
        %1146 = vmatpush1.xpose.msra.mxu0 %v1145
        %v1147 = vand.u32 %v297, 4294901760
        %1148 = vmatprep.subr.mxu0 %v1147
        %v1149 = vand.u32 %v296, 4294901760
        %1150 = vmatpush1.xpose.msra.mxu0 %v1149
        %v1151 = vand.u32 %v299, 4294901760
        %1152 = vmatprep.subr.mxu0 %v1151
        %v1153 = vand.u32 %v298, 4294901760
        %1154 = vmatpush1.xpose.msra.mxu0 %v1153
        %v1155 = vand.u32 %v301, 4294901760
        %1156 = vmatprep.subr.mxu0 %v1155
        %v1157 = vand.u32 %v300, 4294901760
        %1158 = vmatpush1.xpose.msra.mxu0 %v1157
        %v1159 = vand.u32 %v303, 4294901760
        %1160 = vmatprep.subr.mxu0 %v1159
        %v1161 = vand.u32 %v302, 4294901760
        %1162 = vmatpush1.xpose.msra.mxu0 %v1161
        %v1163 = vand.u32 %v305, 4294901760
        %1164 = vmatprep.subr.mxu0 %v1163
        %v1165 = vand.u32 %v304, 4294901760
        %1166 = vmatpush1.xpose.msra.mxu0 %v1165
        %v1167 = vand.u32 %v307, 4294901760
        %1168 = vmatprep.subr.mxu0 %v1167
        %v1169 = vand.u32 %v306, 4294901760
        %1170 = vmatpush1.xpose.msra.mxu0 %v1169
        %v1171 = vand.u32 %v309, 4294901760
        %1172 = vmatprep.subr.mxu0 %v1171
        %v1173 = vand.u32 %v308, 4294901760
        %1174 = vmatpush1.xpose.msra.mxu0 %v1173
        %v1175 = vand.u32 %v311, 4294901760
        %1176 = vmatprep.subr.mxu0 %v1175
        %v1177 = vand.u32 %v310, 4294901760
        %1178 = vmatpush1.xpose.msra.mxu0 %v1177
        %v1179 = vand.u32 %v313, 4294901760
        %1180 = vmatprep.subr.mxu0 %v1179
        %v1181 = vand.u32 %v312, 4294901760
        %1182 = vmatpush1.xpose.msra.mxu0 %v1181
        %v1183 = vand.u32 %v315, 4294901760
        %1184 = vmatprep.subr.mxu0 %v1183
        %v1185 = vand.u32 %v314, 4294901760
        %1186 = vmatpush1.xpose.msra.mxu0 %v1185
        %v1187 = vand.u32 %v317, 4294901760
        %v1188 = vsub.f32 %v317, %v1187
        %v1189 = vand.u32 %v1188, 4294901760
        %1190 = vmatprep.mubr.f32.mxu0 %v1189
        %v1191 = vand.u32 %v316, 4294901760
        %v1192 = vsub.f32 %v316, %v1191
        %v1193 = vand.u32 %v1192, 4294901760
        %1194 = vmatmul.mubr.f32.gmra.mrb[0].mxu0 %v1193
        %v1195 = vpop.f32.mrb[0].mxu0
        %v1196 = vadd.f32 %v1055, %v1195
        %v1197 = vpop.f32.mrb[0].mxu0
        %v1198 = vadd.f32 %v1057, %v1197
        %1199 = vdwg.mxu0
        %v1200 = vand.u32 %v253, 4294901760
        %v1201 = vsub.f32 %v253, %v1200
        %v1202 = vand.u32 %v1201, 4294901760
        %1203 = vmatprep.subr.mxu0 %v1202
        %v1204 = vand.u32 %v252, 4294901760
        %v1205 = vsub.f32 %v252, %v1204
        %v1206 = vand.u32 %v1205, 4294901760
        %1207 = vmatpush1.xpose.msra.mxu0 %v1206
        %v1208 = vand.u32 %v255, 4294901760
        %v1209 = vsub.f32 %v255, %v1208
        %v1210 = vand.u32 %v1209, 4294901760
        %1211 = vmatprep.subr.mxu0 %v1210
        %v1212 = vand.u32 %v254, 4294901760
        %v1213 = vsub.f32 %v254, %v1212
        %v1214 = vand.u32 %v1213, 4294901760
        %1215 = vmatpush1.xpose.msra.mxu0 %v1214
        %v1216 = vand.u32 %v257, 4294901760
        %v1217 = vsub.f32 %v257, %v1216
        %v1218 = vand.u32 %v1217, 4294901760
        %1219 = vmatprep.subr.mxu0 %v1218
        %v1220 = vand.u32 %v256, 4294901760
        %v1221 = vsub.f32 %v256, %v1220
        %v1222 = vand.u32 %v1221, 4294901760
        %1223 = vmatpush1.xpose.msra.mxu0 %v1222
        %v1224 = vand.u32 %v259, 4294901760
        %v1225 = vsub.f32 %v259, %v1224
        %v1226 = vand.u32 %v1225, 4294901760
        %1227 = vmatprep.subr.mxu0 %v1226
        %v1228 = vand.u32 %v258, 4294901760
        %v1229 = vsub.f32 %v258, %v1228
        %v1230 = vand.u32 %v1229, 4294901760
        %1231 = vmatpush1.xpose.msra.mxu0 %v1230
        %v1232 = vand.u32 %v261, 4294901760
        %v1233 = vsub.f32 %v261, %v1232
        %v1234 = vand.u32 %v1233, 4294901760
        %1235 = vmatprep.subr.mxu0 %v1234
        %v1236 = vand.u32 %v260, 4294901760
        %v1237 = vsub.f32 %v260, %v1236
        %v1238 = vand.u32 %v1237, 4294901760
        %1239 = vmatpush1.xpose.msra.mxu0 %v1238
        %v1240 = vand.u32 %v263, 4294901760
        %v1241 = vsub.f32 %v263, %v1240
        %v1242 = vand.u32 %v1241, 4294901760
        %1243 = vmatprep.subr.mxu0 %v1242
        %v1244 = vand.u32 %v262, 4294901760
        %v1245 = vsub.f32 %v262, %v1244
        %v1246 = vand.u32 %v1245, 4294901760
        %1247 = vmatpush1.xpose.msra.mxu0 %v1246
        %v1248 = vand.u32 %v265, 4294901760
        %v1249 = vsub.f32 %v265, %v1248
        %v1250 = vand.u32 %v1249, 4294901760
        %1251 = vmatprep.subr.mxu0 %v1250
        %v1252 = vand.u32 %v264, 4294901760
        %v1253 = vsub.f32 %v264, %v1252
        %v1254 = vand.u32 %v1253, 4294901760
        %1255 = vmatpush1.xpose.msra.mxu0 %v1254
        %v1256 = vand.u32 %v267, 4294901760
        %v1257 = vsub.f32 %v267, %v1256
        %v1258 = vand.u32 %v1257, 4294901760
        %1259 = vmatprep.subr.mxu0 %v1258
        %v1260 = vand.u32 %v266, 4294901760
        %v1261 = vsub.f32 %v266, %v1260
        %v1262 = vand.u32 %v1261, 4294901760
        %1263 = vmatpush1.xpose.msra.mxu0 %v1262
        %v1264 = vand.u32 %v269, 4294901760
        %v1265 = vsub.f32 %v269, %v1264
        %v1266 = vand.u32 %v1265, 4294901760
        %1267 = vmatprep.subr.mxu0 %v1266
        %v1268 = vand.u32 %v268, 4294901760
        %v1269 = vsub.f32 %v268, %v1268
        %v1270 = vand.u32 %v1269, 4294901760
        %1271 = vmatpush1.xpose.msra.mxu0 %v1270
        %v1272 = vand.u32 %v271, 4294901760
        %v1273 = vsub.f32 %v271, %v1272
        %v1274 = vand.u32 %v1273, 4294901760
        %1275 = vmatprep.subr.mxu0 %v1274
        %v1276 = vand.u32 %v270, 4294901760
        %v1277 = vsub.f32 %v270, %v1276
        %v1278 = vand.u32 %v1277, 4294901760
        %1279 = vmatpush1.xpose.msra.mxu0 %v1278
        %v1280 = vand.u32 %v273, 4294901760
        %v1281 = vsub.f32 %v273, %v1280
        %v1282 = vand.u32 %v1281, 4294901760
        %1283 = vmatprep.subr.mxu0 %v1282
        %v1284 = vand.u32 %v272, 4294901760
        %v1285 = vsub.f32 %v272, %v1284
        %v1286 = vand.u32 %v1285, 4294901760
        %1287 = vmatpush1.xpose.msra.mxu0 %v1286
        %v1288 = vand.u32 %v275, 4294901760
        %v1289 = vsub.f32 %v275, %v1288
        %v1290 = vand.u32 %v1289, 4294901760
        %1291 = vmatprep.subr.mxu0 %v1290
        %v1292 = vand.u32 %v274, 4294901760
        %v1293 = vsub.f32 %v274, %v1292
        %v1294 = vand.u32 %v1293, 4294901760
        %1295 = vmatpush1.xpose.msra.mxu0 %v1294
        %v1296 = vand.u32 %v277, 4294901760
        %v1297 = vsub.f32 %v277, %v1296
        %v1298 = vand.u32 %v1297, 4294901760
        %1299 = vmatprep.subr.mxu0 %v1298
        %v1300 = vand.u32 %v276, 4294901760
        %v1301 = vsub.f32 %v276, %v1300
        %v1302 = vand.u32 %v1301, 4294901760
        %1303 = vmatpush1.xpose.msra.mxu0 %v1302
        %v1304 = vand.u32 %v279, 4294901760
        %v1305 = vsub.f32 %v279, %v1304
        %v1306 = vand.u32 %v1305, 4294901760
        %1307 = vmatprep.subr.mxu0 %v1306
        %v1308 = vand.u32 %v278, 4294901760
        %v1309 = vsub.f32 %v278, %v1308
        %v1310 = vand.u32 %v1309, 4294901760
        %1311 = vmatpush1.xpose.msra.mxu0 %v1310
        %v1312 = vand.u32 %v281, 4294901760
        %v1313 = vsub.f32 %v281, %v1312
        %v1314 = vand.u32 %v1313, 4294901760
        %1315 = vmatprep.subr.mxu0 %v1314
        %v1316 = vand.u32 %v280, 4294901760
        %v1317 = vsub.f32 %v280, %v1316
        %v1318 = vand.u32 %v1317, 4294901760
        %1319 = vmatpush1.xpose.msra.mxu0 %v1318
        %v1320 = vand.u32 %v283, 4294901760
        %v1321 = vsub.f32 %v283, %v1320
        %v1322 = vand.u32 %v1321, 4294901760
        %1323 = vmatprep.subr.mxu0 %v1322
        %v1324 = vand.u32 %v282, 4294901760
        %v1325 = vsub.f32 %v282, %v1324
        %v1326 = vand.u32 %v1325, 4294901760
        %1327 = vmatpush1.xpose.msra.mxu0 %v1326
        %v1328 = vand.u32 %v285, 4294901760
        %v1329 = vsub.f32 %v285, %v1328
        %v1330 = vand.u32 %v1329, 4294901760
        %1331 = vmatprep.subr.mxu0 %v1330
        %v1332 = vand.u32 %v284, 4294901760
        %v1333 = vsub.f32 %v284, %v1332
        %v1334 = vand.u32 %v1333, 4294901760
        %1335 = vmatpush1.xpose.msra.mxu0 %v1334
        %v1336 = vand.u32 %v287, 4294901760
        %v1337 = vsub.f32 %v287, %v1336
        %v1338 = vand.u32 %v1337, 4294901760
        %1339 = vmatprep.subr.mxu0 %v1338
        %v1340 = vand.u32 %v286, 4294901760
        %v1341 = vsub.f32 %v286, %v1340
        %v1342 = vand.u32 %v1341, 4294901760
        %1343 = vmatpush1.xpose.msra.mxu0 %v1342
        %v1344 = vand.u32 %v289, 4294901760
        %v1345 = vsub.f32 %v289, %v1344
        %v1346 = vand.u32 %v1345, 4294901760
        %1347 = vmatprep.subr.mxu0 %v1346
        %v1348 = vand.u32 %v288, 4294901760
        %v1349 = vsub.f32 %v288, %v1348
        %v1350 = vand.u32 %v1349, 4294901760
        %1351 = vmatpush1.xpose.msra.mxu0 %v1350
        %v1352 = vand.u32 %v291, 4294901760
        %v1353 = vsub.f32 %v291, %v1352
        %v1354 = vand.u32 %v1353, 4294901760
        %1355 = vmatprep.subr.mxu0 %v1354
        %v1356 = vand.u32 %v290, 4294901760
        %v1357 = vsub.f32 %v290, %v1356
        %v1358 = vand.u32 %v1357, 4294901760
        %1359 = vmatpush1.xpose.msra.mxu0 %v1358
        %v1360 = vand.u32 %v293, 4294901760
        %v1361 = vsub.f32 %v293, %v1360
        %v1362 = vand.u32 %v1361, 4294901760
        %1363 = vmatprep.subr.mxu0 %v1362
        %v1364 = vand.u32 %v292, 4294901760
        %v1365 = vsub.f32 %v292, %v1364
        %v1366 = vand.u32 %v1365, 4294901760
        %1367 = vmatpush1.xpose.msra.mxu0 %v1366
        %v1368 = vand.u32 %v295, 4294901760
        %v1369 = vsub.f32 %v295, %v1368
        %v1370 = vand.u32 %v1369, 4294901760
        %1371 = vmatprep.subr.mxu0 %v1370
        %v1372 = vand.u32 %v294, 4294901760
        %v1373 = vsub.f32 %v294, %v1372
        %v1374 = vand.u32 %v1373, 4294901760
        %1375 = vmatpush1.xpose.msra.mxu0 %v1374
        %v1376 = vand.u32 %v297, 4294901760
        %v1377 = vsub.f32 %v297, %v1376
        %v1378 = vand.u32 %v1377, 4294901760
        %1379 = vmatprep.subr.mxu0 %v1378
        %v1380 = vand.u32 %v296, 4294901760
        %v1381 = vsub.f32 %v296, %v1380
        %v1382 = vand.u32 %v1381, 4294901760
        %1383 = vmatpush1.xpose.msra.mxu0 %v1382
        %v1384 = vand.u32 %v299, 4294901760
        %v1385 = vsub.f32 %v299, %v1384
        %v1386 = vand.u32 %v1385, 4294901760
        %1387 = vmatprep.subr.mxu0 %v1386
        %v1388 = vand.u32 %v298, 4294901760
        %v1389 = vsub.f32 %v298, %v1388
        %v1390 = vand.u32 %v1389, 4294901760
        %1391 = vmatpush1.xpose.msra.mxu0 %v1390
        %v1392 = vand.u32 %v301, 4294901760
        %v1393 = vsub.f32 %v301, %v1392
        %v1394 = vand.u32 %v1393, 4294901760
        %1395 = vmatprep.subr.mxu0 %v1394
        %v1396 = vand.u32 %v300, 4294901760
        %v1397 = vsub.f32 %v300, %v1396
        %v1398 = vand.u32 %v1397, 4294901760
        %1399 = vmatpush1.xpose.msra.mxu0 %v1398
        %v1400 = vand.u32 %v303, 4294901760
        %v1401 = vsub.f32 %v303, %v1400
        %v1402 = vand.u32 %v1401, 4294901760
        %1403 = vmatprep.subr.mxu0 %v1402
        %v1404 = vand.u32 %v302, 4294901760
        %v1405 = vsub.f32 %v302, %v1404
        %v1406 = vand.u32 %v1405, 4294901760
        %1407 = vmatpush1.xpose.msra.mxu0 %v1406
        %v1408 = vand.u32 %v305, 4294901760
        %v1409 = vsub.f32 %v305, %v1408
        %v1410 = vand.u32 %v1409, 4294901760
        %1411 = vmatprep.subr.mxu0 %v1410
        %v1412 = vand.u32 %v304, 4294901760
        %v1413 = vsub.f32 %v304, %v1412
        %v1414 = vand.u32 %v1413, 4294901760
        %1415 = vmatpush1.xpose.msra.mxu0 %v1414
        %v1416 = vand.u32 %v307, 4294901760
        %v1417 = vsub.f32 %v307, %v1416
        %v1418 = vand.u32 %v1417, 4294901760
        %1419 = vmatprep.subr.mxu0 %v1418
        %v1420 = vand.u32 %v306, 4294901760
        %v1421 = vsub.f32 %v306, %v1420
        %v1422 = vand.u32 %v1421, 4294901760
        %1423 = vmatpush1.xpose.msra.mxu0 %v1422
        %v1424 = vand.u32 %v309, 4294901760
        %v1425 = vsub.f32 %v309, %v1424
        %v1426 = vand.u32 %v1425, 4294901760
        %1427 = vmatprep.subr.mxu0 %v1426
        %v1428 = vand.u32 %v308, 4294901760
        %v1429 = vsub.f32 %v308, %v1428
        %v1430 = vand.u32 %v1429, 4294901760
        %1431 = vmatpush1.xpose.msra.mxu0 %v1430
        %v1432 = vand.u32 %v311, 4294901760
        %v1433 = vsub.f32 %v311, %v1432
        %v1434 = vand.u32 %v1433, 4294901760
        %1435 = vmatprep.subr.mxu0 %v1434
        %v1436 = vand.u32 %v310, 4294901760
        %v1437 = vsub.f32 %v310, %v1436
        %v1438 = vand.u32 %v1437, 4294901760
        %1439 = vmatpush1.xpose.msra.mxu0 %v1438
        %v1440 = vand.u32 %v313, 4294901760
        %v1441 = vsub.f32 %v313, %v1440
        %v1442 = vand.u32 %v1441, 4294901760
        %1443 = vmatprep.subr.mxu0 %v1442
        %v1444 = vand.u32 %v312, 4294901760
        %v1445 = vsub.f32 %v312, %v1444
        %v1446 = vand.u32 %v1445, 4294901760
        %1447 = vmatpush1.xpose.msra.mxu0 %v1446
        %v1448 = vand.u32 %v315, 4294901760
        %v1449 = vsub.f32 %v315, %v1448
        %v1450 = vand.u32 %v1449, 4294901760
        %1451 = vmatprep.subr.mxu0 %v1450
        %v1452 = vand.u32 %v314, 4294901760
        %v1453 = vsub.f32 %v314, %v1452
        %v1454 = vand.u32 %v1453, 4294901760
        %1455 = vmatpush1.xpose.msra.mxu0 %v1454
        %v1456 = vand.u32 %v317, 4294901760
        %1457 = vmatprep.mubr.f32.mxu0 %v1456
        %v1458 = vand.u32 %v316, 4294901760
        %1459 = vmatmul.mubr.f32.gmra.mrb[0].mxu0 %v1458
        %v1460 = vpop.f32.mrb[0].mxu0
        %v1461 = vadd.f32 %v1196, %v1460
        %v1462 = vpop.f32.mrb[0].mxu0
        %v1463 = vadd.f32 %v1198, %v1462
        %1464 = vdwg.mxu0
        %v1465 = vand.u32 %v253, 4294901760
        %1466 = vmatprep.subr.mxu0 %v1465
        %v1467 = vand.u32 %v252, 4294901760
        %1468 = vmatpush1.xpose.msra.mxu0 %v1467
        %v1469 = vand.u32 %v255, 4294901760
        %1470 = vmatprep.subr.mxu0 %v1469
        %v1471 = vand.u32 %v254, 4294901760
        %1472 = vmatpush1.xpose.msra.mxu0 %v1471
        %v1473 = vand.u32 %v257, 4294901760
        %1474 = vmatprep.subr.mxu0 %v1473
        %v1475 = vand.u32 %v256, 4294901760
        %1476 = vmatpush1.xpose.msra.mxu0 %v1475
        %v1477 = vand.u32 %v259, 4294901760
        %1478 = vmatprep.subr.mxu0 %v1477
        %v1479 = vand.u32 %v258, 4294901760
        %1480 = vmatpush1.xpose.msra.mxu0 %v1479
        %v1481 = vand.u32 %v261, 4294901760
        %1482 = vmatprep.subr.mxu0 %v1481
        %v1483 = vand.u32 %v260, 4294901760
        %1484 = vmatpush1.xpose.msra.mxu0 %v1483
        %v1485 = vand.u32 %v263, 4294901760
        %1486 = vmatprep.subr.mxu0 %v1485
        %v1487 = vand.u32 %v262, 4294901760
        %1488 = vmatpush1.xpose.msra.mxu0 %v1487
        %v1489 = vand.u32 %v265, 4294901760
        %1490 = vmatprep.subr.mxu0 %v1489
        %v1491 = vand.u32 %v264, 4294901760
        %1492 = vmatpush1.xpose.msra.mxu0 %v1491
        %v1493 = vand.u32 %v267, 4294901760
        %1494 = vmatprep.subr.mxu0 %v1493
        %v1495 = vand.u32 %v266, 4294901760
        %1496 = vmatpush1.xpose.msra.mxu0 %v1495
        %v1497 = vand.u32 %v269, 4294901760
        %1498 = vmatprep.subr.mxu0 %v1497
        %v1499 = vand.u32 %v268, 4294901760
        %1500 = vmatpush1.xpose.msra.mxu0 %v1499
        %v1501 = vand.u32 %v271, 4294901760
        %1502 = vmatprep.subr.mxu0 %v1501
        %v1503 = vand.u32 %v270, 4294901760
        %1504 = vmatpush1.xpose.msra.mxu0 %v1503
        %v1505 = vand.u32 %v273, 4294901760
        %1506 = vmatprep.subr.mxu0 %v1505
        %v1507 = vand.u32 %v272, 4294901760
        %1508 = vmatpush1.xpose.msra.mxu0 %v1507
        %v1509 = vand.u32 %v275, 4294901760
        %1510 = vmatprep.subr.mxu0 %v1509
        %v1511 = vand.u32 %v274, 4294901760
        %1512 = vmatpush1.xpose.msra.mxu0 %v1511
        %v1513 = vand.u32 %v277, 4294901760
        %1514 = vmatprep.subr.mxu0 %v1513
        %v1515 = vand.u32 %v276, 4294901760
        %1516 = vmatpush1.xpose.msra.mxu0 %v1515
        %v1517 = vand.u32 %v279, 4294901760
        %1518 = vmatprep.subr.mxu0 %v1517
        %v1519 = vand.u32 %v278, 4294901760
        %1520 = vmatpush1.xpose.msra.mxu0 %v1519
        %v1521 = vand.u32 %v281, 4294901760
        %1522 = vmatprep.subr.mxu0 %v1521
        %v1523 = vand.u32 %v280, 4294901760
        %1524 = vmatpush1.xpose.msra.mxu0 %v1523
        %v1525 = vand.u32 %v283, 4294901760
        %1526 = vmatprep.subr.mxu0 %v1525
        %v1527 = vand.u32 %v282, 4294901760
        %1528 = vmatpush1.xpose.msra.mxu0 %v1527
        %v1529 = vand.u32 %v285, 4294901760
        %1530 = vmatprep.subr.mxu0 %v1529
        %v1531 = vand.u32 %v284, 4294901760
        %1532 = vmatpush1.xpose.msra.mxu0 %v1531
        %v1533 = vand.u32 %v287, 4294901760
        %1534 = vmatprep.subr.mxu0 %v1533
        %v1535 = vand.u32 %v286, 4294901760
        %1536 = vmatpush1.xpose.msra.mxu0 %v1535
        %v1537 = vand.u32 %v289, 4294901760
        %1538 = vmatprep.subr.mxu0 %v1537
        %v1539 = vand.u32 %v288, 4294901760
        %1540 = vmatpush1.xpose.msra.mxu0 %v1539
        %v1541 = vand.u32 %v291, 4294901760
        %1542 = vmatprep.subr.mxu0 %v1541
        %v1543 = vand.u32 %v290, 4294901760
        %1544 = vmatpush1.xpose.msra.mxu0 %v1543
        %v1545 = vand.u32 %v293, 4294901760
        %1546 = vmatprep.subr.mxu0 %v1545
        %v1547 = vand.u32 %v292, 4294901760
        %1548 = vmatpush1.xpose.msra.mxu0 %v1547
        %v1549 = vand.u32 %v295, 4294901760
        %1550 = vmatprep.subr.mxu0 %v1549
        %v1551 = vand.u32 %v294, 4294901760
        %1552 = vmatpush1.xpose.msra.mxu0 %v1551
        %v1553 = vand.u32 %v297, 4294901760
        %1554 = vmatprep.subr.mxu0 %v1553
        %v1555 = vand.u32 %v296, 4294901760
        %1556 = vmatpush1.xpose.msra.mxu0 %v1555
        %v1557 = vand.u32 %v299, 4294901760
        %1558 = vmatprep.subr.mxu0 %v1557
        %v1559 = vand.u32 %v298, 4294901760
        %1560 = vmatpush1.xpose.msra.mxu0 %v1559
        %v1561 = vand.u32 %v301, 4294901760
        %1562 = vmatprep.subr.mxu0 %v1561
        %v1563 = vand.u32 %v300, 4294901760
        %1564 = vmatpush1.xpose.msra.mxu0 %v1563
        %v1565 = vand.u32 %v303, 4294901760
        %1566 = vmatprep.subr.mxu0 %v1565
        %v1567 = vand.u32 %v302, 4294901760
        %1568 = vmatpush1.xpose.msra.mxu0 %v1567
        %v1569 = vand.u32 %v305, 4294901760
        %1570 = vmatprep.subr.mxu0 %v1569
        %v1571 = vand.u32 %v304, 4294901760
        %1572 = vmatpush1.xpose.msra.mxu0 %v1571
        %v1573 = vand.u32 %v307, 4294901760
        %1574 = vmatprep.subr.mxu0 %v1573
        %v1575 = vand.u32 %v306, 4294901760
        %1576 = vmatpush1.xpose.msra.mxu0 %v1575
        %v1577 = vand.u32 %v309, 4294901760
        %1578 = vmatprep.subr.mxu0 %v1577
        %v1579 = vand.u32 %v308, 4294901760
        %1580 = vmatpush1.xpose.msra.mxu0 %v1579
        %v1581 = vand.u32 %v311, 4294901760
        %1582 = vmatprep.subr.mxu0 %v1581
        %v1583 = vand.u32 %v310, 4294901760
        %1584 = vmatpush1.xpose.msra.mxu0 %v1583
        %v1585 = vand.u32 %v313, 4294901760
        %1586 = vmatprep.subr.mxu0 %v1585
        %v1587 = vand.u32 %v312, 4294901760
        %1588 = vmatpush1.xpose.msra.mxu0 %v1587
        %v1589 = vand.u32 %v315, 4294901760
        %1590 = vmatprep.subr.mxu0 %v1589
        %v1591 = vand.u32 %v314, 4294901760
        %1592 = vmatpush1.xpose.msra.mxu0 %v1591
        %v1593 = vand.u32 %v317, 4294901760
        %1594 = vmatprep.mubr.f32.mxu0 %v1593
        %v1595 = vand.u32 %v316, 4294901760
        %1596 = vmatmul.mubr.f32.gmra.mrb[0].mxu0 %v1595
        %v1597 = vpop.f32.mrb[0].mxu0
        %v1598 = vadd.f32 %v1461, %v1597
        %v1599 = vpop.f32.mrb[0].mxu0
        %v1600 = vadd.f32 %v1463, %v1599
        %1601 = vdwg.mxu0
        %s1602 = sld [smem:[#allocation2]]
        %v1603 = vstv %s1602
        %v1604 = vadd.f32 %v1598, %v1603
        %v1605 = vadd.f32 %v1600, %v1603
        %v1606 = vld [vmem:[%s249] sm:$0x3]
        %v1607 = vmul.f32 %v1606, 0.17
        %v1609 = vlaneseq
        %v1610 = vshrl.u32 %v1609, 7
        %v1611 = vsub.s32 0, %v1610
        %v1612 = vrot.slane %v1607, %v1611
        %v1613 = vlaneseq
        %v1614 = vshrl.u32 %v1613, 7
        %v1615 = vsub.s32 1, %v1614
        %v1616 = vrot.slane %v1607, %v1615
        %v1619 = vadd.f32 %v1604, %v1612
        %v1620 = vadd.f32 %v1605, %v1616
        %v1621 = vxor.u32 %v1619, 2147483648
        %v1622 = vxor.u32 %v1620, 2147483648
        %v1623 = vmul.f32 %v1621, 1.442695
        %v1624 = vpow.pop %v1623
        %v1625 = vmul.f32 %v1622, 1.442695
        %v1626 = vpow.pop %v1625
        %v1627 = vadd.f32 %v1624, 1.0
        %v1628 = vadd.f32 %v1626, 1.0
        %v1629 = vrcp.pop %v1627
        %v1630 = vmul.f32 1.0, %v1629
        %v1631 = vrcp.pop %v1628
        %v1632 = vmul.f32 1.0, %v1631
        %v1635 = vcombine.low %v1630, %v1632
        %v1637 = vunpack.c.l.s4 1966171168
        %v1638 = vunpack.c.0.s8 %v1637
        %v1639 = vlaneseq
        %v1640 = vshrl.u32 %v1639, 7
        %v1641 = vsub.s32 %v1638, %v1640
        %v1642 = vrot.slane %v1635, %v1641
        %v1644 = vunpack.c.l.s4 1966171168
        %v1645 = vunpack.c.0.s8 %v1644
        %v1646 = vlaneseq
        %v1647 = vshrl.u32 %v1646, 7
        %v1648 = vsub.s32 %v1645, %v1647
        %v1649 = vrot.slane %v1642, %v1648
        %v1651 = vlaneseq
        %vm1652 = vcmp.ge.s32.totalorder %v1651, 0
        %vm1653 = vcmp.lt.s32.totalorder %v1651, 256
        %vm1654 = vmand %vm1652, %vm1653
        %1655 = vst.msk [vmem:[%s244] sm:$0x3] %vm1654, %v1649
        %s1656 = sand.u32 %s125, 1
        %s1657 = scalar_lea.sflag [#allocation5], %s1656
        %s1658 = sand.u32 %s125, 1
        %s1659 = smul.addr %s1658, 2
        %s1660 = scalar_lea.vmem [#allocation8], %s1659
        // Predicated region
        $region45: #{tpu_custom_call.1} parent=35 // pred_check
          %p1661 = pneg %p135
        $region46: #{tpu_custom_call.1} parent=35 // pred_check_branch
          %1663 = sbr.rel (%p1661) target = $region48
        $region47: #{tpu_custom_call.1} parent=35 // pred_region
          %s1664 = smul.u32 2, %s23
          %s1666 = ssub.s32 32, 32
          %1667 = vsyncadd %s1657, %s1666
          %s1668 = smul.addr %s1664, 16
          %s1669 = scalar_lea.hbm %s4, %s1668
          %s1671 = sshll.u32 %s1660, 4
          %s1672 = int_to_ptr.vmem [resolvable:$true] %s1671
          %1674 = dma.vmem_to_hbm [thread:$0]  %s1672, 32, %s1669, %s1657
        $region48: #{tpu_custom_call.1} parent=35 // pred_fallthru
          _
      $region36: #{tpu_custom_call.1} parent=5 // pred_fallthru
        _
      %p1675 = scmp.le.s32.totalorder 2, %s18
      // Predicated region
      $region49: #{tpu_custom_call.1} parent=5 // pred_check
        %p1676 = pneg %p1675
      $region50: #{tpu_custom_call.1} parent=5 // pred_check_branch
        %1678 = sbr.rel (%p1676) target = $region52
      $region51: #{tpu_custom_call.1} parent=5 // pred_region
        %s1679 = ssub.s32 %s18, 2
        // Predicated region
        $region53: #{tpu_custom_call.1} parent=51 // pred_check
          %p1680 = pneg %p141
        $region54: #{tpu_custom_call.1} parent=51 // pred_check_branch
          %1682 = sbr.rel (%p1680) target = $region56
        $region55: #{tpu_custom_call.1} parent=51 // pred_region
          %s1683 = sand.u32 %s126, 1
          %s1684 = scalar_lea.sflag [#allocation5], %s1683
          %s1685 = sand.u32 %s126, 1
          %s1686 = smul.addr %s1685, 2
          %s1687 = scalar_lea.vmem [#allocation8], %s1686
          %1688 = dma.done %s1684, 32
        $region56: #{tpu_custom_call.1} parent=51 // pred_fallthru
          _
      $region52: #{tpu_custom_call.1} parent=5 // pred_fallthru
        _
    $region6: #{tpu_custom_call.1} parent=1 // loop_footer
      %s22 = sadd.s32 1, %s18
    $region7: #{tpu_custom_call.1} parent=1 // loop_footer_branch
      %17 = sbr.rel target = $region3
    $region8: #{tpu_custom_call.1} parent=1 // loop_exit
      _
    %1689 = vsyncpa [#allocation4], 1
    %s1690 = scalar_lea.sflag [#allocation4], 1
    %1691 = vsyncpa %s1690, 1
    %1692 = vsyncpa [#allocation7], 1
    %1693 = vsyncpa [#allocation5], 1
    %s1694 = scalar_lea.sflag [#allocation5], 1
    %1695 = vsyncpa %s1694, 1

</llo_original>
